<compile_context>
chip_gen: v5e
topology: v5e:2x2
jax: 0.10.0
libtpu: 0.0.40
codegen_flags: <defaults>
</compile_context>

<pallas_src>
import math
from dataclasses import dataclass

import jax
import jax.numpy as jnp
from jax import lax
from jax.experimental import pallas as pl
from jax.experimental.pallas import tpu as pltpu


@dataclass
class GaussianAdapterERPCfg:
    gaussian_scale_min: float
    gaussian_scale_max: float
    sh_degree: int


def _sh_mask(d_sh, sh_degree):
    mask = [1.0] * d_sh
    for degree in range(1, sh_degree + 1):
        for i in range(degree ** 2, (degree + 1) ** 2):
            mask[i] = 0.1 * 0.25 ** degree
    return mask


def _pick_tile(r, tile_rays):
    """Largest TR <= tile_rays that is a multiple of 128 and divides r; else r."""
    if r <= tile_rays:
        return r
    best = None
    for tr in range(128, min(tile_rays, r) + 1, 128):
        if r % tr == 0:
            best = tr
    return best if best is not None else r


def _make_kernel(cfg, h, w, d_sh, eps):
    scale_min = float(cfg.gaussian_scale_min)
    scale_max = float(cfg.gaussian_scale_max)
    scale_rng = scale_max - scale_min
    pixel_size = 1.0 / max(w, h)
    mask = _sh_mask(d_sh, cfg.sh_degree)

    def kernel(ext_ref, raw_ref, dep_ref, dir_ref,
               means_ref, cov_ref, sh_ref, scl_ref, rot_ref):
        bv = pl.program_id(0)
        ebase = bv * 16

        depth = dep_ref[...]                      # (1, TR), lane-dense

        # ---------------- scales: (3, TR) ----------------
        s_raw = raw_ref[0:3, :]
        sig = 1.0 / (1.0 + jnp.exp(-s_raw))       # exp on EUP, exact divide for accuracy
        scales = (scale_min + scale_rng * sig) * (depth * pixel_size)
        scl_ref[...] = scales

        # ------------- rotations: unit quaternion (w, x, y, z) -------------
        q = raw_ref[3:7, :]                       # (4, TR)
        inv_norm = lax.rsqrt(jnp.sum(q * q, axis=0, keepdims=True) + eps * eps)  # EUP rsqrt
        qn = q * inv_norm
        rot_ref[...] = qn

        qw = qn[0:1, :]
        qx = qn[1:2, :]
        qy = qn[2:3, :]
        qz = qn[3:4, :]
        r00 = 1.0 - 2.0 * (qy * qy + qz * qz)
        r01 = 2.0 * (qx * qy - qw * qz)
        r02 = 2.0 * (qx * qz + qw * qy)
        r10 = 2.0 * (qx * qy + qw * qz)
        r11 = 1.0 - 2.0 * (qx * qx + qz * qz)
        r12 = 2.0 * (qy * qz - qw * qx)
        r20 = 2.0 * (qx * qz - qw * qy)
        r21 = 2.0 * (qy * qz + qw * qx)
        r22 = 1.0 - 2.0 * (qx * qx + qy * qy)
        Rq = [[r00, r01, r02], [r10, r11, r12], [r20, r21, r22]]

        # c2w rotation / translation scalars from flat SMEM (row-major 4x4 per bv)
        C = [[ext_ref[ebase + 4 * i + j] for j in range(3)] for i in range(3)]
        T = [ext_ref[ebase + 4 * i + 3] for i in range(3)]

        # ------------- covariances: (Rc2w Rq) diag(s^2) (Rc2w Rq)^T -------------
        M = [[C[i][0] * Rq[0][k] + C[i][1] * Rq[1][k] + C[i][2] * Rq[2][k]
              for k in range(3)] for i in range(3)]
        s2 = [scales[k:k + 1, :] * scales[k:k + 1, :] for k in range(3)]
        Ms = [[M[i][k] * s2[k] for k in range(3)] for i in range(3)]
        for i in range(3):
            for j in range(3):
                cov_ref[3 * i + j: 3 * i + j + 1, :] = (Ms[i][0] * M[j][0]
                                                        + Ms[i][1] * M[j][1]
                                                        + Ms[i][2] * M[j][2])

        # ------------- spherical harmonics: mask + rotate degree-1 band by c2w -------------
        # Degree-1 real-SH basis order is (y, z, x): D1[a][b] = C[p[a]][p[b]] with p=(1,2,0).
        p = (1, 2, 0)
        for ch in range(3):
            ib = 7 + ch * d_sh
            ob = ch * d_sh
            # DC term: mask == 1.0, straight row copy (skip the no-op multiply).
            sh_ref[ob:ob + 1, :] = raw_ref[ib:ib + 1, :]
            if d_sh >= 4:
                m1 = mask[1]                       # constant over the band -> fold after rotation
                band = (raw_ref[ib + 1:ib + 2, :],
                        raw_ref[ib + 2:ib + 3, :],
                        raw_ref[ib + 3:ib + 4, :])
                for a in range(3):
                    sh_ref[ob + 1 + a: ob + 2 + a, :] = m1 * (
                        C[p[a]][p[0]] * band[0]
                        + C[p[a]][p[1]] * band[1]
                        + C[p[a]][p[2]] * band[2])
            # TODO(synk): rotate_sh for degrees >= 2 requires Wigner-D matrices (e3nn);
            #             those bands are masked but left unrotated.
            for k in range(4, d_sh):
                sh_ref[ob + k: ob + k + 1, :] = mask[k] * raw_ref[ib + k: ib + k + 1, :]

        # ------------- means via ERP sphere unprojection (dirs precomputed) -------------
        # TODO(synk): exact Utils360 direction convention unavailable; using
        #             dir = (cos(lat)sin(lon), -sin(lat), cos(lat)cos(lon)).
        dirs = dir_ref[...]                        # (3, TR)
        px = depth * dirs[0:1, :]
        py = depth * dirs[1:2, :]
        pz = depth * dirs[2:3, :]
        means_ref[0:1, :] = C[0][0] * px + C[0][1] * py + C[0][2] * pz + T[0]
        means_ref[1:2, :] = C[1][0] * px + C[1][1] * py + C[1][2] * pz + T[1]
        means_ref[2:3, :] = C[2][0] * px + C[2][1] * py + C[2][2] * pz + T[2]

    return kernel


def gaussian_adapter_erp(cfg, extrinsics, depths, opacities, raw_gaussians,
                         image_shape, eps=1e-8, tile_rays=1024):
    """Pallas implementation of GaussianAdapterERP.forward.

    Shapes (matching the PyTorch module):
      extrinsics    : (b, v, 1, 1, 1, 4, 4)
      depths        : (b, v, r, 1, 1)           r = h*w
      opacities     : (b, v, r, 1, 1)
      raw_gaussians : (b, v, r, 1, 1, 7 + 3*d_sh)
    """
    h, w = image_shape
    b, v = extrinsics.shape[0], extrinsics.shape[1]
    r = h * w
    d_sh = (cfg.sh_degree + 1) ** 2
    d_in = 7 + 3 * d_sh
    BV = b * v
    TR = _pick_tile(r, int(tile_rays))
    assert r % TR == 0

    # --- channel-major, rays-last layout (layout plumbing stays in the wrapper) ---
    ext_flat = extrinsics.reshape(BV * 16).astype(jnp.float32)                       # 1-D SMEM
    raw_cm = jnp.transpose(
        raw_gaussians.reshape(BV, r, d_in).astype(jnp.float32), (0, 2, 1))           # (BV, d_in, r)
    dep_cm = depths.reshape(BV, 1, r).astype(jnp.float32)                            # (BV, 1, r)

    # pixel-grid -> ERP direction table, computed once (shared across all views)
    yy, xx = jnp.meshgrid(jnp.arange(h, dtype=jnp.float32),
                          jnp.arange(w, dtype=jnp.float32), indexing="ij")
    lon = (xx.reshape(-1) + 0.5) / w * (2.0 * math.pi) - math.pi
    lat = math.pi / 2.0 - (yy.reshape(-1) + 0.5) / h * math.pi
    dirs = jnp.stack([jnp.cos(lat) * jnp.sin(lon),
                      -jnp.sin(lat),
                      jnp.cos(lat) * jnp.cos(lon)], axis=0).astype(jnp.float32)      # (3, r)

    kernel = _make_kernel(cfg, h, w, d_sh, eps)

    out_shapes = (
        jax.ShapeDtypeStruct((BV, 3, r), jnp.float32),           # means
        jax.ShapeDtypeStruct((BV, 9, r), jnp.float32),           # covariances (row-major 3x3)
        jax.ShapeDtypeStruct((BV, 3 * d_sh, r), jnp.float32),    # harmonics
        jax.ShapeDtypeStruct((BV, 3, r), jnp.float32),           # scales
        jax.ShapeDtypeStruct((BV, 4, r), jnp.float32),           # rotations
    )

    means, cov, sh, scales, rot = pl.pallas_call(
        kernel,
        out_shape=out_shapes,
        grid_spec=pltpu.PrefetchScalarGridSpec(
            num_scalar_prefetch=0,
            grid=(BV, r // TR),
            in_specs=[
                pl.BlockSpec(memory_space=pltpu.MemorySpace.SMEM),                    # extrinsics (flat)
                pl.BlockSpec((None, d_in, TR), lambda bv, rt: (bv, 0, rt)),           # raw gaussians
                pl.BlockSpec((None, 1, TR), lambda bv, rt: (bv, 0, rt)),              # depths
                pl.BlockSpec((3, TR), lambda bv, rt: (0, rt)),                        # direction table
            ],
            out_specs=[
                pl.BlockSpec((None, 3, TR), lambda bv, rt: (bv, 0, rt)),
                pl.BlockSpec((None, 9, TR), lambda bv, rt: (bv, 0, rt)),
                pl.BlockSpec((None, 3 * d_sh, TR), lambda bv, rt: (bv, 0, rt)),
                pl.BlockSpec((None, 3, TR), lambda bv, rt: (bv, 0, rt)),
                pl.BlockSpec((None, 4, TR), lambda bv, rt: (bv, 0, rt)),
            ],
        ),
        compiler_params=pltpu.CompilerParams(
            dimension_semantics=("parallel", "parallel")),
    )(ext_flat, raw_cm, dep_cm, dirs)

    def back(x):  # (BV, C, r) -> (b, v, r, 1, 1, C)
        c = x.shape[1]
        return jnp.transpose(x, (0, 2, 1)).reshape(b, v, r, 1, 1, c)

    return {
        "means": back(means),
        "covariances": back(cov).reshape(b, v, r, 1, 1, 3, 3),
        "harmonics": back(sh).reshape(b, v, r, 1, 1, 3, d_sh),
        "opacities": opacities,
        "scales": back(scales),
        "rotations": back(rot),
    }


# ------------------------- pure-JAX reference (for checking) -------------------------
def reference(cfg, extrinsics, depths, opacities, raw_gaussians, image_shape, eps=1e-8):
    h, w = image_shape
    b, v = extrinsics.shape[:2]
    r = h * w
    d_sh = (cfg.sh_degree + 1) ** 2
    raw = raw_gaussians.reshape(b, v, r, -1).astype(jnp.float32)
    dep = depths.reshape(b, v, r).astype(jnp.float32)
    ext = extrinsics.reshape(b, v, 4, 4).astype(jnp.float32)
    Rc, t = ext[..., :3, :3], ext[..., :3, 3]

    s_raw, q_raw, sh_raw = raw[..., :3], raw[..., 3:7], raw[..., 7:]
    smin, smax = cfg.gaussian_scale_min, cfg.gaussian_scale_max
    pixel_size = 1.0 / max(h, w)
    scales = (smin + (smax - smin) * jax.nn.sigmoid(s_raw)) * dep[..., None] * pixel_size
    qn = q_raw / (jnp.linalg.norm(q_raw, axis=-1, keepdims=True) + eps)

    qw, qx, qy, qz = [qn[..., i] for i in range(4)]
    Rq = jnp.stack([
        jnp.stack([1 - 2 * (qy * qy + qz * qz), 2 * (qx * qy - qw * qz), 2 * (qx * qz + qw * qy)], -1),
        jnp.stack([2 * (qx * qy + qw * qz), 1 - 2 * (qx * qx + qz * qz), 2 * (qy * qz - qw * qx)], -1),
        jnp.stack([2 * (qx * qz - qw * qy), 2 * (qy * qz + qw * qx), 1 - 2 * (qx * qx + qy * qy)], -1),
    ], -2)
    M = jnp.einsum("bvij,bvrjk->bvrik", Rc, Rq)
    cov = jnp.einsum("bvrik,bvrk,bvrjk->bvrij", M, scales ** 2, M)

    mask = jnp.asarray(_sh_mask(d_sh, cfg.sh_degree), jnp.float32)
    sh = sh_raw.reshape(b, v, r, 3, d_sh) * mask
    if d_sh >= 4:
        p = jnp.asarray([1, 2, 0])
        D1 = Rc[..., p[:, None], p[None, :]]
        blk = jnp.einsum("bvij,bvrcj->bvrci", D1, sh[..., 1:4])
        sh = sh.at[..., 1:4].set(blk)

    yy, xx = jnp.meshgrid(jnp.arange(h, dtype=jnp.float32),
                          jnp.arange(w, dtype=jnp.float32), indexing="ij")
    lon = (xx.reshape(-1) + 0.5) / w * (2.0 * jnp.pi) - jnp.pi
    lat = jnp.pi / 2.0 - (yy.reshape(-1) + 0.5) / h * jnp.pi
    dirs = jnp.stack([jnp.cos(lat) * jnp.sin(lon), -jnp.sin(lat), jnp.cos(lat) * jnp.cos(lon)], -1)
    pcam = dep[..., None] * dirs
    means = jnp.einsum("bvij,bvrj->bvri", Rc, pcam) + t[:, :, None, :]

    return {
        "means": means.reshape(b, v, r, 1, 1, 3),
        "covariances": cov.reshape(b, v, r, 1, 1, 3, 3),
        "harmonics": sh.reshape(b, v, r, 1, 1, 3, d_sh),
        "opacities": opacities,
        "scales": scales.reshape(b, v, r, 1, 1, 3),
        "rotations": qn.reshape(b, v, r, 1, 1, 4),
    }


if __name__ == "__main__":
    cfg = GaussianAdapterERPCfg(gaussian_scale_min=0.5, gaussian_scale_max=15.0, sh_degree=1)
    b, v = 2, 2
    h, w = 16, 16
    r = h * w
    d_sh = (cfg.sh_degree + 1) ** 2
    d_in = 7 + 3 * d_sh

    key = jax.random.PRNGKey(0)
    k1, k2, k3, k4 = jax.random.split(key, 4)

    # deterministic c2w extrinsics: rotation from a random unit quaternion + translation
    q = jax.random.normal(k1, (b, v, 4))
    q = q / jnp.linalg.norm(q, axis=-1, keepdims=True)
    qw, qx, qy, qz = [q[..., i] for i in range(4)]
    R = jnp.stack([
        jnp.stack([1 - 2 * (qy * qy + qz * qz), 2 * (qx * qy - qw * qz), 2 * (qx * qz + qw * qy)], -1),
        jnp.stack([2 * (qx * qy + qw * qz), 1 - 2 * (qx * qx + qz * qz), 2 * (qy * qz - qw * qx)], -1),
        jnp.stack([2 * (qx * qz - qw * qy), 2 * (qy * qz + qw * qx), 1 - 2 * (qx * qx + qy * qy)], -1),
    ], -2)
    t = jax.random.normal(k2, (b, v, 3))
    ext = (jnp.zeros((b, v, 4, 4))
           .at[..., :3, :3].set(R)
           .at[..., :3, 3].set(t)
           .at[..., 3, 3].set(1.0))
    extrinsics = ext.reshape(b, v, 1, 1, 1, 4, 4)

    depths = jax.random.uniform(k3, (b, v, r, 1, 1), minval=0.5, maxval=5.0)
    opacities = jax.random.uniform(k4, (b, v, r, 1, 1))
    raw_gaussians = jax.random.normal(jax.random.PRNGKey(1), (b, v, r, 1, 1, d_in))

    out = gaussian_adapter_erp(cfg, extrinsics, depths, opacities, raw_gaussians, (h, w))
    out = jax.tree_util.tree_map(jax.block_until_ready, out)

    ref = reference(cfg, extrinsics, depths, opacities, raw_gaussians, (h, w))
    for name in ("means", "covariances", "harmonics", "scales", "rotations"):
        assert jnp.allclose(out[name], ref[name], atol=1e-4, rtol=1e-4), name

    print("KERNEL_OK")
</pallas_src>

<mosaic_0001>
module attributes {stable_mosaic.version = 11 : i64} {
  func.func @kernel(%arg0: i32, %arg1: i32, %arg2: memref<64xf32, #tpu.memory_space<smem>>, %arg3: memref<1x19x256xf32, #tpu.memory_space<vmem>>, %arg4: memref<1x1x256xf32, #tpu.memory_space<vmem>>, %arg5: memref<3x256xf32, #tpu.memory_space<vmem>>, %arg6: memref<1x3x256xf32, #tpu.memory_space<vmem>>, %arg7: memref<1x9x256xf32, #tpu.memory_space<vmem>>, %arg8: memref<1x12x256xf32, #tpu.memory_space<vmem>>, %arg9: memref<1x3x256xf32, #tpu.memory_space<vmem>>, %arg10: memref<1x4x256xf32, #tpu.memory_space<vmem>>) attributes {dimension_semantics = [#tpu.dimension_semantics<parallel>, #tpu.dimension_semantics<parallel>], iteration_bounds = array<i64: 4, 1>, scalar_prefetch = 0 : i64, scratch_operands = 0 : i64, tpu.core_type = #tpu.core_type<tc>, window_params = [{transform_indices = @transform_0, window_bounds = array<i64: 64>}, {transform_indices = @transform_1, window_bounds = array<i64: 1, 19, 256>}, {transform_indices = @transform_2, window_bounds = array<i64: 1, 1, 256>}, {transform_indices = @transform_3, window_bounds = array<i64: 3, 256>}, {transform_indices = @transform_4, window_bounds = array<i64: 1, 3, 256>}, {transform_indices = @transform_5, window_bounds = array<i64: 1, 9, 256>}, {transform_indices = @transform_6, window_bounds = array<i64: 1, 12, 256>}, {transform_indices = @transform_7, window_bounds = array<i64: 1, 3, 256>}, {transform_indices = @transform_8, window_bounds = array<i64: 1, 4, 256>}]} {
    %c16_i32 = arith.constant 16 : i32
    %0 = arith.muli %arg0, %c16_i32 : i32
    %c0 = arith.constant 0 : index
    %c0_0 = arith.constant 0 : index
    %c0_1 = arith.constant 0 : index
    %1 = vector.load %arg4[%c0, %c0_0, %c0_1] : memref<1x1x256xf32, #tpu.memory_space<vmem>>, vector<1x1x256xf32>
    %2 = vector.shape_cast %1 : vector<1x1x256xf32> to vector<1x256xf32>
    %c0_2 = arith.constant 0 : index
    %c0_3 = arith.constant 0 : index
    %c0_4 = arith.constant 0 : index
    %3 = vector.load %arg3[%c0_2, %c0_3, %c0_4] : memref<1x19x256xf32, #tpu.memory_space<vmem>>, vector<1x3x256xf32>
    %4 = vector.shape_cast %3 : vector<1x3x256xf32> to vector<3x256xf32>
    %cst = arith.constant 0.000000e+00 : f32
    %5 = vector.broadcast %cst : f32 to vector<3x256xf32>
    %6 = arith.subf %5, %4 : vector<3x256xf32>
    %7 = math.exp %6 : vector<3x256xf32>
    %cst_5 = arith.constant 1.000000e+00 : f32
    %8 = vector.broadcast %cst_5 : f32 to vector<3x256xf32>
    %9 = arith.addf %8, %7 : vector<3x256xf32>
    %cst_6 = arith.constant 1.000000e+00 : f32
    %10 = vector.broadcast %cst_6 : f32 to vector<3x256xf32>
    %11 = arith.divf %10, %9 : vector<3x256xf32>
    %cst_7 = arith.constant 1.450000e+01 : f32
    %12 = vector.broadcast %cst_7 : f32 to vector<3x256xf32>
    %13 = arith.mulf %12, %11 : vector<3x256xf32>
    %cst_8 = arith.constant 5.000000e-01 : f32
    %14 = vector.broadcast %cst_8 : f32 to vector<3x256xf32>
    %15 = arith.addf %14, %13 : vector<3x256xf32>
    %cst_9 = arith.constant 6.250000e-02 : f32
    %16 = vector.broadcast %cst_9 : f32 to vector<1x256xf32>
    %17 = arith.mulf %2, %16 : vector<1x256xf32>
    %18 = vector.broadcast %17 : vector<1x256xf32> to vector<3x256xf32>
    %19 = arith.mulf %15, %18 : vector<3x256xf32>
    %c0_10 = arith.constant 0 : index
    %c0_11 = arith.constant 0 : index
    %c0_12 = arith.constant 0 : index
    %20 = vector.load %arg9[%c0_10, %c0_11, %c0_12] : memref<1x3x256xf32, #tpu.memory_space<vmem>>, vector<1x3x256xf32>
    %21 = vector.shape_cast %20 : vector<1x3x256xf32> to vector<3x256xf32>
    %22 = vector.shape_cast %19 : vector<3x256xf32> to vector<1x3x256xf32>
    tpu.vector_store %arg9[%c0_10, %c0_11, %c0_12], %22 {strides = array<i32>} : memref<1x3x256xf32, #tpu.memory_space<vmem>>, vector<1x3x256xf32>,
    %c0_13 = arith.constant 0 : index
    %c3 = arith.constant 3 : index
    %c0_14 = arith.constant 0 : index
    %23 = vector.load %arg3[%c0_13, %c3, %c0_14] : memref<1x19x256xf32, #tpu.memory_space<vmem>>, vector<1x4x256xf32>
    %24 = vector.shape_cast %23 : vector<1x4x256xf32> to vector<4x256xf32>
    %25 = arith.mulf %24, %24 : vector<4x256xf32>
    %cst_15 = arith.constant dense<0.000000e+00> : vector<256xf32>
    %26 = vector.multi_reduction <add>, %25, %cst_15 [0] : vector<4x256xf32> to vector<256xf32>
    %27 = vector.shape_cast %26 : vector<256xf32> to vector<1x256xf32>
    %cst_16 = arith.constant 1.000000e-16 : f32
    %28 = vector.broadcast %cst_16 : f32 to vector<1x256xf32>
    %29 = arith.addf %27, %28 : vector<1x256xf32>
    %30 = math.rsqrt %29 : vector<1x256xf32>
    %31 = vector.broadcast %30 : vector<1x256xf32> to vector<4x256xf32>
    %32 = arith.mulf %24, %31 : vector<4x256xf32>
    %c0_17 = arith.constant 0 : index
    %c0_18 = arith.constant 0 : index
    %c0_19 = arith.constant 0 : index
    %33 = vector.load %arg10[%c0_17, %c0_18, %c0_19] : memref<1x4x256xf32, #tpu.memory_space<vmem>>, vector<1x4x256xf32>
    %34 = vector.shape_cast %33 : vector<1x4x256xf32> to vector<4x256xf32>
    %35 = vector.shape_cast %32 : vector<4x256xf32> to vector<1x4x256xf32>
    tpu.vector_store %arg10[%c0_17, %c0_18, %c0_19], %35 {strides = array<i32>} : memref<1x4x256xf32, #tpu.memory_space<vmem>>, vector<1x4x256xf32>,
    %36 = vector.extract_strided_slice %32 {offsets = [0, 0], sizes = [1, 256], strides = [1, 1]} : vector<4x256xf32> to vector<1x256xf32>
    %37 = vector.extract_strided_slice %32 {offsets = [1, 0], sizes = [1, 256], strides = [1, 1]} : vector<4x256xf32> to vector<1x256xf32>
    %38 = vector.extract_strided_slice %32 {offsets = [2, 0], sizes = [1, 256], strides = [1, 1]} : vector<4x256xf32> to vector<1x256xf32>
    %39 = vector.extract_strided_slice %32 {offsets = [3, 0], sizes = [1, 256], strides = [1, 1]} : vector<4x256xf32> to vector<1x256xf32>
    %40 = arith.mulf %38, %38 : vector<1x256xf32>
    %41 = arith.mulf %39, %39 : vector<1x256xf32>
    %42 = arith.addf %40, %41 : vector<1x256xf32>
    %cst_20 = arith.constant 2.000000e+00 : f32
    %43 = vector.broadcast %cst_20 : f32 to vector<1x256xf32>
    %44 = arith.mulf %43, %42 : vector<1x256xf32>
    %cst_21 = arith.constant 1.000000e+00 : f32
    %45 = vector.broadcast %cst_21 : f32 to vector<1x256xf32>
    %46 = arith.subf %45, %44 : vector<1x256xf32>
    %47 = arith.mulf %37, %38 : vector<1x256xf32>
    %48 = arith.mulf %36, %39 : vector<1x256xf32>
    %49 = arith.subf %47, %48 : vector<1x256xf32>
    %cst_22 = arith.constant 2.000000e+00 : f32
    %50 = vector.broadcast %cst_22 : f32 to vector<1x256xf32>
    %51 = arith.mulf %50, %49 : vector<1x256xf32>
    %52 = arith.mulf %37, %39 : vector<1x256xf32>
    %53 = arith.mulf %36, %38 : vector<1x256xf32>
    %54 = arith.addf %52, %53 : vector<1x256xf32>
    %cst_23 = arith.constant 2.000000e+00 : f32
    %55 = vector.broadcast %cst_23 : f32 to vector<1x256xf32>
    %56 = arith.mulf %55, %54 : vector<1x256xf32>
    %57 = arith.mulf %37, %38 : vector<1x256xf32>
    %58 = arith.mulf %36, %39 : vector<1x256xf32>
    %59 = arith.addf %57, %58 : vector<1x256xf32>
    %cst_24 = arith.constant 2.000000e+00 : f32
    %60 = vector.broadcast %cst_24 : f32 to vector<1x256xf32>
    %61 = arith.mulf %60, %59 : vector<1x256xf32>
    %62 = arith.mulf %37, %37 : vector<1x256xf32>
    %63 = arith.mulf %39, %39 : vector<1x256xf32>
    %64 = arith.addf %62, %63 : vector<1x256xf32>
    %cst_25 = arith.constant 2.000000e+00 : f32
    %65 = vector.broadcast %cst_25 : f32 to vector<1x256xf32>
    %66 = arith.mulf %65, %64 : vector<1x256xf32>
    %cst_26 = arith.constant 1.000000e+00 : f32
    %67 = vector.broadcast %cst_26 : f32 to vector<1x256xf32>
    %68 = arith.subf %67, %66 : vector<1x256xf32>
    %69 = arith.mulf %38, %39 : vector<1x256xf32>
    %70 = arith.mulf %36, %37 : vector<1x256xf32>
    %71 = arith.subf %69, %70 : vector<1x256xf32>
    %cst_27 = arith.constant 2.000000e+00 : f32
    %72 = vector.broadcast %cst_27 : f32 to vector<1x256xf32>
    %73 = arith.mulf %72, %71 : vector<1x256xf32>
    %74 = arith.mulf %37, %39 : vector<1x256xf32>
    %75 = arith.mulf %36, %38 : vector<1x256xf32>
    %76 = arith.subf %74, %75 : vector<1x256xf32>
    %cst_28 = arith.constant 2.000000e+00 : f32
    %77 = vector.broadcast %cst_28 : f32 to vector<1x256xf32>
    %78 = arith.mulf %77, %76 : vector<1x256xf32>
    %79 = arith.mulf %38, %39 : vector<1x256xf32>
    %80 = arith.mulf %36, %37 : vector<1x256xf32>
    %81 = arith.addf %79, %80 : vector<1x256xf32>
    %cst_29 = arith.constant 2.000000e+00 : f32
    %82 = vector.broadcast %cst_29 : f32 to vector<1x256xf32>
    %83 = arith.mulf %82, %81 : vector<1x256xf32>
    %84 = arith.mulf %37, %37 : vector<1x256xf32>
    %85 = arith.mulf %38, %38 : vector<1x256xf32>
    %86 = arith.addf %84, %85 : vector<1x256xf32>
    %cst_30 = arith.constant 2.000000e+00 : f32
    %87 = vector.broadcast %cst_30 : f32 to vector<1x256xf32>
    %88 = arith.mulf %87, %86 : vector<1x256xf32>
    %cst_31 = arith.constant 1.000000e+00 : f32
    %89 = vector.broadcast %cst_31 : f32 to vector<1x256xf32>
    %90 = arith.subf %89, %88 : vector<1x256xf32>
    %c0_i32 = arith.constant 0 : i32
    %91 = arith.addi %0, %c0_i32 : i32
    %c0_i32_32 = arith.constant 0 : i32
    %92 = arith.addi %91, %c0_i32_32 : i32
    %93 = arith.index_cast %92 : i32 to index
    %94 = memref.load %arg2[%93] : memref<64xf32, #tpu.memory_space<smem>>
    %c0_i32_33 = arith.constant 0 : i32
    %95 = arith.addi %0, %c0_i32_33 : i32
    %c1_i32 = arith.constant 1 : i32
    %96 = arith.addi %95, %c1_i32 : i32
    %97 = arith.index_cast %96 : i32 to index
    %98 = memref.load %arg2[%97] : memref<64xf32, #tpu.memory_space<smem>>
    %c0_i32_34 = arith.constant 0 : i32
    %99 = arith.addi %0, %c0_i32_34 : i32
    %c2_i32 = arith.constant 2 : i32
    %100 = arith.addi %99, %c2_i32 : i32
    %101 = arith.index_cast %100 : i32 to index
    %102 = memref.load %arg2[%101] : memref<64xf32, #tpu.memory_space<smem>>
    %c4_i32 = arith.constant 4 : i32
    %103 = arith.addi %0, %c4_i32 : i32
    %c0_i32_35 = arith.constant 0 : i32
    %104 = arith.addi %103, %c0_i32_35 : i32
    %105 = arith.index_cast %104 : i32 to index
    %106 = memref.load %arg2[%105] : memref<64xf32, #tpu.memory_space<smem>>
    %c4_i32_36 = arith.constant 4 : i32
    %107 = arith.addi %0, %c4_i32_36 : i32
    %c1_i32_37 = arith.constant 1 : i32
    %108 = arith.addi %107, %c1_i32_37 : i32
    %109 = arith.index_cast %108 : i32 to index
    %110 = memref.load %arg2[%109] : memref<64xf32, #tpu.memory_space<smem>>
    %c4_i32_38 = arith.constant 4 : i32
    %111 = arith.addi %0, %c4_i32_38 : i32
    %c2_i32_39 = arith.constant 2 : i32
    %112 = arith.addi %111, %c2_i32_39 : i32
    %113 = arith.index_cast %112 : i32 to index
    %114 = memref.load %arg2[%113] : memref<64xf32, #tpu.memory_space<smem>>
    %c8_i32 = arith.constant 8 : i32
    %115 = arith.addi %0, %c8_i32 : i32
    %c0_i32_40 = arith.constant 0 : i32
    %116 = arith.addi %115, %c0_i32_40 : i32
    %117 = arith.index_cast %116 : i32 to index
    %118 = memref.load %arg2[%117] : memref<64xf32, #tpu.memory_space<smem>>
    %c8_i32_41 = arith.constant 8 : i32
    %119 = arith.addi %0, %c8_i32_41 : i32
    %c1_i32_42 = arith.constant 1 : i32
    %120 = arith.addi %119, %c1_i32_42 : i32
    %121 = arith.index_cast %120 : i32 to index
    %122 = memref.load %arg2[%121] : memref<64xf32, #tpu.memory_space<smem>>
    %c8_i32_43 = arith.constant 8 : i32
    %123 = arith.addi %0, %c8_i32_43 : i32
    %c2_i32_44 = arith.constant 2 : i32
    %124 = arith.addi %123, %c2_i32_44 : i32
    %125 = arith.index_cast %124 : i32 to index
    %126 = memref.load %arg2[%125] : memref<64xf32, #tpu.memory_space<smem>>
    %c0_i32_45 = arith.constant 0 : i32
    %127 = arith.addi %0, %c0_i32_45 : i32
    %c3_i32 = arith.constant 3 : i32
    %128 = arith.addi %127, %c3_i32 : i32
    %129 = arith.index_cast %128 : i32 to index
    %130 = memref.load %arg2[%129] : memref<64xf32, #tpu.memory_space<smem>>
    %c4_i32_46 = arith.constant 4 : i32
    %131 = arith.addi %0, %c4_i32_46 : i32
    %c3_i32_47 = arith.constant 3 : i32
    %132 = arith.addi %131, %c3_i32_47 : i32
    %133 = arith.index_cast %132 : i32 to index
    %134 = memref.load %arg2[%133] : memref<64xf32, #tpu.memory_space<smem>>
    %c8_i32_48 = arith.constant 8 : i32
    %135 = arith.addi %0, %c8_i32_48 : i32
    %c3_i32_49 = arith.constant 3 : i32
    %136 = arith.addi %135, %c3_i32_49 : i32
    %137 = arith.index_cast %136 : i32 to index
    %138 = memref.load %arg2[%137] : memref<64xf32, #tpu.memory_space<smem>>
    %139 = vector.broadcast %94 : f32 to vector<1x256xf32>
    %140 = arith.mulf %139, %46 : vector<1x256xf32>
    %141 = vector.broadcast %98 : f32 to vector<1x256xf32>
    %142 = arith.mulf %141, %61 : vector<1x256xf32>
    %143 = arith.addf %140, %142 : vector<1x256xf32>
    %144 = vector.broadcast %102 : f32 to vector<1x256xf32>
    %145 = arith.mulf %144, %78 : vector<1x256xf32>
    %146 = arith.addf %143, %145 : vector<1x256xf32>
    %147 = vector.broadcast %94 : f32 to vector<1x256xf32>
    %148 = arith.mulf %147, %51 : vector<1x256xf32>
    %149 = vector.broadcast %98 : f32 to vector<1x256xf32>
    %150 = arith.mulf %149, %68 : vector<1x256xf32>
    %151 = arith.addf %148, %150 : vector<1x256xf32>
    %152 = vector.broadcast %102 : f32 to vector<1x256xf32>
    %153 = arith.mulf %152, %83 : vector<1x256xf32>
    %154 = arith.addf %151, %153 : vector<1x256xf32>
    %155 = vector.broadcast %94 : f32 to vector<1x256xf32>
    %156 = arith.mulf %155, %56 : vector<1x256xf32>
    %157 = vector.broadcast %98 : f32 to vector<1x256xf32>
    %158 = arith.mulf %157, %73 : vector<1x256xf32>
    %159 = arith.addf %156, %158 : vector<1x256xf32>
    %160 = vector.broadcast %102 : f32 to vector<1x256xf32>
    %161 = arith.mulf %160, %90 : vector<1x256xf32>
    %162 = arith.addf %159, %161 : vector<1x256xf32>
    %163 = vector.broadcast %106 : f32 to vector<1x256xf32>
    %164 = arith.mulf %163, %46 : vector<1x256xf32>
    %165 = vector.broadcast %110 : f32 to vector<1x256xf32>
    %166 = arith.mulf %165, %61 : vector<1x256xf32>
    %167 = arith.addf %164, %166 : vector<1x256xf32>
    %168 = vector.broadcast %114 : f32 to vector<1x256xf32>
    %169 = arith.mulf %168, %78 : vector<1x256xf32>
    %170 = arith.addf %167, %169 : vector<1x256xf32>
    %171 = vector.broadcast %106 : f32 to vector<1x256xf32>
    %172 = arith.mulf %171, %51 : vector<1x256xf32>
    %173 = vector.broadcast %110 : f32 to vector<1x256xf32>
    %174 = arith.mulf %173, %68 : vector<1x256xf32>
    %175 = arith.addf %172, %174 : vector<1x256xf32>
    %176 = vector.broadcast %114 : f32 to vector<1x256xf32>
    %177 = arith.mulf %176, %83 : vector<1x256xf32>
    %178 = arith.addf %175, %177 : vector<1x256xf32>
    %179 = vector.broadcast %106 : f32 to vector<1x256xf32>
    %180 = arith.mulf %179, %56 : vector<1x256xf32>
    %181 = vector.broadcast %110 : f32 to vector<1x256xf32>
    %182 = arith.mulf %181, %73 : vector<1x256xf32>
    %183 = arith.addf %180, %182 : vector<1x256xf32>
    %184 = vector.broadcast %114 : f32 to vector<1x256xf32>
    %185 = arith.mulf %184, %90 : vector<1x256xf32>
    %186 = arith.addf %183, %185 : vector<1x256xf32>
    %187 = vector.broadcast %118 : f32 to vector<1x256xf32>
    %188 = arith.mulf %187, %46 : vector<1x256xf32>
    %189 = vector.broadcast %122 : f32 to vector<1x256xf32>
    %190 = arith.mulf %189, %61 : vector<1x256xf32>
    %191 = arith.addf %188, %190 : vector<1x256xf32>
    %192 = vector.broadcast %126 : f32 to vector<1x256xf32>
    %193 = arith.mulf %192, %78 : vector<1x256xf32>
    %194 = arith.addf %191, %193 : vector<1x256xf32>
    %195 = vector.broadcast %118 : f32 to vector<1x256xf32>
    %196 = arith.mulf %195, %51 : vector<1x256xf32>
    %197 = vector.broadcast %122 : f32 to vector<1x256xf32>
    %198 = arith.mulf %197, %68 : vector<1x256xf32>
    %199 = arith.addf %196, %198 : vector<1x256xf32>
    %200 = vector.broadcast %126 : f32 to vector<1x256xf32>
    %201 = arith.mulf %200, %83 : vector<1x256xf32>
    %202 = arith.addf %199, %201 : vector<1x256xf32>
    %203 = vector.broadcast %118 : f32 to vector<1x256xf32>
    %204 = arith.mulf %203, %56 : vector<1x256xf32>
    %205 = vector.broadcast %122 : f32 to vector<1x256xf32>
    %206 = arith.mulf %205, %73 : vector<1x256xf32>
    %207 = arith.addf %204, %206 : vector<1x256xf32>
    %208 = vector.broadcast %126 : f32 to vector<1x256xf32>
    %209 = arith.mulf %208, %90 : vector<1x256xf32>
    %210 = arith.addf %207, %209 : vector<1x256xf32>
    %211 = vector.extract_strided_slice %19 {offsets = [0, 0], sizes = [1, 256], strides = [1, 1]} : vector<3x256xf32> to vector<1x256xf32>
    %212 = vector.extract_strided_slice %19 {offsets = [0, 0], sizes = [1, 256], strides = [1, 1]} : vector<3x256xf32> to vector<1x256xf32>
    %213 = arith.mulf %211, %212 : vector<1x256xf32>
    %214 = vector.extract_strided_slice %19 {offsets = [1, 0], sizes = [1, 256], strides = [1, 1]} : vector<3x256xf32> to vector<1x256xf32>
    %215 = vector.extract_strided_slice %19 {offsets = [1, 0], sizes = [1, 256], strides = [1, 1]} : vector<3x256xf32> to vector<1x256xf32>
    %216 = arith.mulf %214, %215 : vector<1x256xf32>
    %217 = vector.extract_strided_slice %19 {offsets = [2, 0], sizes = [1, 256], strides = [1, 1]} : vector<3x256xf32> to vector<1x256xf32>
    %218 = vector.extract_strided_slice %19 {offsets = [2, 0], sizes = [1, 256], strides = [1, 1]} : vector<3x256xf32> to vector<1x256xf32>
    %219 = arith.mulf %217, %218 : vector<1x256xf32>
    %220 = arith.mulf %146, %213 : vector<1x256xf32>
    %221 = arith.mulf %154, %216 : vector<1x256xf32>
    %222 = arith.mulf %162, %219 : vector<1x256xf32>
    %223 = arith.mulf %170, %213 : vector<1x256xf32>
    %224 = arith.mulf %178, %216 : vector<1x256xf32>
    %225 = arith.mulf %186, %219 : vector<1x256xf32>
    %226 = arith.mulf %194, %213 : vector<1x256xf32>
    %227 = arith.mulf %202, %216 : vector<1x256xf32>
    %228 = arith.mulf %210, %219 : vector<1x256xf32>
    %229 = arith.mulf %220, %146 : vector<1x256xf32>
    %230 = arith.mulf %221, %154 : vector<1x256xf32>
    %231 = arith.addf %229, %230 : vector<1x256xf32>
    %232 = arith.mulf %222, %162 : vector<1x256xf32>
    %233 = arith.addf %231, %232 : vector<1x256xf32>
    %c0_50 = arith.constant 0 : index
    %c0_51 = arith.constant 0 : index
    %c0_52 = arith.constant 0 : index
    %234 = vector.load %arg7[%c0_50, %c0_51, %c0_52] : memref<1x9x256xf32, #tpu.memory_space<vmem>>, vector<1x1x256xf32>
    %235 = vector.shape_cast %234 : vector<1x1x256xf32> to vector<1x256xf32>
    %236 = vector.shape_cast %233 : vector<1x256xf32> to vector<1x1x256xf32>
    tpu.vector_store %arg7[%c0_50, %c0_51, %c0_52], %236 {strides = array<i32>} : memref<1x9x256xf32, #tpu.memory_space<vmem>>, vector<1x1x256xf32>,
    %237 = arith.mulf %220, %170 : vector<1x256xf32>
    %238 = arith.mulf %221, %178 : vector<1x256xf32>
    %239 = arith.addf %237, %238 : vector<1x256xf32>
    %240 = arith.mulf %222, %186 : vector<1x256xf32>
    %241 = arith.addf %239, %240 : vector<1x256xf32>
    %c0_53 = arith.constant 0 : index
    %c1 = arith.constant 1 : index
    %c0_54 = arith.constant 0 : index
    %242 = vector.load %arg7[%c0_53, %c1, %c0_54] : memref<1x9x256xf32, #tpu.memory_space<vmem>>, vector<1x1x256xf32>
    %243 = vector.shape_cast %242 : vector<1x1x256xf32> to vector<1x256xf32>
    %244 = vector.shape_cast %241 : vector<1x256xf32> to vector<1x1x256xf32>
    tpu.vector_store %arg7[%c0_53, %c1, %c0_54], %244 {strides = array<i32>} : memref<1x9x256xf32, #tpu.memory_space<vmem>>, vector<1x1x256xf32>,
    %245 = arith.mulf %220, %194 : vector<1x256xf32>
    %246 = arith.mulf %221, %202 : vector<1x256xf32>
    %247 = arith.addf %245, %246 : vector<1x256xf32>
    %248 = arith.mulf %222, %210 : vector<1x256xf32>
    %249 = arith.addf %247, %248 : vector<1x256xf32>
    %c0_55 = arith.constant 0 : index
    %c2 = arith.constant 2 : index
    %c0_56 = arith.constant 0 : index
    %250 = vector.load %arg7[%c0_55, %c2, %c0_56] : memref<1x9x256xf32, #tpu.memory_space<vmem>>, vector<1x1x256xf32>
    %251 = vector.shape_cast %250 : vector<1x1x256xf32> to vector<1x256xf32>
    %252 = vector.shape_cast %249 : vector<1x256xf32> to vector<1x1x256xf32>
    tpu.vector_store %arg7[%c0_55, %c2, %c0_56], %252 {strides = array<i32>} : memref<1x9x256xf32, #tpu.memory_space<vmem>>, vector<1x1x256xf32>,
    %253 = arith.mulf %223, %146 : vector<1x256xf32>
    %254 = arith.mulf %224, %154 : vector<1x256xf32>
    %255 = arith.addf %253, %254 : vector<1x256xf32>
    %256 = arith.mulf %225, %162 : vector<1x256xf32>
    %257 = arith.addf %255, %256 : vector<1x256xf32>
    %c0_57 = arith.constant 0 : index
    %c3_58 = arith.constant 3 : index
    %c0_59 = arith.constant 0 : index
    %258 = vector.load %arg7[%c0_57, %c3_58, %c0_59] : memref<1x9x256xf32, #tpu.memory_space<vmem>>, vector<1x1x256xf32>
    %259 = vector.shape_cast %258 : vector<1x1x256xf32> to vector<1x256xf32>
    %260 = vector.shape_cast %257 : vector<1x256xf32> to vector<1x1x256xf32>
    tpu.vector_store %arg7[%c0_57, %c3_58, %c0_59], %260 {strides = array<i32>} : memref<1x9x256xf32, #tpu.memory_space<vmem>>, vector<1x1x256xf32>,
    %261 = arith.mulf %223, %170 : vector<1x256xf32>
    %262 = arith.mulf %224, %178 : vector<1x256xf32>
    %263 = arith.addf %261, %262 : vector<1x256xf32>
    %264 = arith.mulf %225, %186 : vector<1x256xf32>
    %265 = arith.addf %263, %264 : vector<1x256xf32>
    %c0_60 = arith.constant 0 : index
    %c4 = arith.constant 4 : index
    %c0_61 = arith.constant 0 : index
    %266 = vector.load %arg7[%c0_60, %c4, %c0_61] : memref<1x9x256xf32, #tpu.memory_space<vmem>>, vector<1x1x256xf32>
    %267 = vector.shape_cast %266 : vector<1x1x256xf32> to vector<1x256xf32>
    %268 = vector.shape_cast %265 : vector<1x256xf32> to vector<1x1x256xf32>
    tpu.vector_store %arg7[%c0_60, %c4, %c0_61], %268 {strides = array<i32>} : memref<1x9x256xf32, #tpu.memory_space<vmem>>, vector<1x1x256xf32>,
    %269 = arith.mulf %223, %194 : vector<1x256xf32>
    %270 = arith.mulf %224, %202 : vector<1x256xf32>
    %271 = arith.addf %269, %270 : vector<1x256xf32>
    %272 = arith.mulf %225, %210 : vector<1x256xf32>
    %273 = arith.addf %271, %272 : vector<1x256xf32>
    %c0_62 = arith.constant 0 : index
    %c5 = arith.constant 5 : index
    %c0_63 = arith.constant 0 : index
    %274 = vector.load %arg7[%c0_62, %c5, %c0_63] : memref<1x9x256xf32, #tpu.memory_space<vmem>>, vector<1x1x256xf32>
    %275 = vector.shape_cast %274 : vector<1x1x256xf32> to vector<1x256xf32>
    %276 = vector.shape_cast %273 : vector<1x256xf32> to vector<1x1x256xf32>
    tpu.vector_store %arg7[%c0_62, %c5, %c0_63], %276 {strides = array<i32>} : memref<1x9x256xf32, #tpu.memory_space<vmem>>, vector<1x1x256xf32>,
    %277 = arith.mulf %226, %146 : vector<1x256xf32>
    %278 = arith.mulf %227, %154 : vector<1x256xf32>
    %279 = arith.addf %277, %278 : vector<1x256xf32>
    %280 = arith.mulf %228, %162 : vector<1x256xf32>
    %281 = arith.addf %279, %280 : vector<1x256xf32>
    %c0_64 = arith.constant 0 : index
    %c6 = arith.constant 6 : index
    %c0_65 = arith.constant 0 : index
    %282 = vector.load %arg7[%c0_64, %c6, %c0_65] : memref<1x9x256xf32, #tpu.memory_space<vmem>>, vector<1x1x256xf32>
    %283 = vector.shape_cast %282 : vector<1x1x256xf32> to vector<1x256xf32>
    %284 = vector.shape_cast %281 : vector<1x256xf32> to vector<1x1x256xf32>
    tpu.vector_store %arg7[%c0_64, %c6, %c0_65], %284 {strides = array<i32>} : memref<1x9x256xf32, #tpu.memory_space<vmem>>, vector<1x1x256xf32>,
    %285 = arith.mulf %226, %170 : vector<1x256xf32>
    %286 = arith.mulf %227, %178 : vector<1x256xf32>
    %287 = arith.addf %285, %286 : vector<1x256xf32>
    %288 = arith.mulf %228, %186 : vector<1x256xf32>
    %289 = arith.addf %287, %288 : vector<1x256xf32>
    %c0_66 = arith.constant 0 : index
    %c7 = arith.constant 7 : index
    %c0_67 = arith.constant 0 : index
    %290 = vector.load %arg7[%c0_66, %c7, %c0_67] : memref<1x9x256xf32, #tpu.memory_space<vmem>>, vector<1x1x256xf32>
    %291 = vector.shape_cast %290 : vector<1x1x256xf32> to vector<1x256xf32>
    %292 = vector.shape_cast %289 : vector<1x256xf32> to vector<1x1x256xf32>
    tpu.vector_store %arg7[%c0_66, %c7, %c0_67], %292 {strides = array<i32>} : memref<1x9x256xf32, #tpu.memory_space<vmem>>, vector<1x1x256xf32>,
    %293 = arith.mulf %226, %194 : vector<1x256xf32>
    %294 = arith.mulf %227, %202 : vector<1x256xf32>
    %295 = arith.addf %293, %294 : vector<1x256xf32>
    %296 = arith.mulf %228, %210 : vector<1x256xf32>
    %297 = arith.addf %295, %296 : vector<1x256xf32>
    %c0_68 = arith.constant 0 : index
    %c8 = arith.constant 8 : index
    %c0_69 = arith.constant 0 : index
    %298 = vector.load %arg7[%c0_68, %c8, %c0_69] : memref<1x9x256xf32, #tpu.memory_space<vmem>>, vector<1x1x256xf32>
    %299 = vector.shape_cast %298 : vector<1x1x256xf32> to vector<1x256xf32>
    %300 = vector.shape_cast %297 : vector<1x256xf32> to vector<1x1x256xf32>
    tpu.vector_store %arg7[%c0_68, %c8, %c0_69], %300 {strides = array<i32>} : memref<1x9x256xf32, #tpu.memory_space<vmem>>, vector<1x1x256xf32>,
    %c0_70 = arith.constant 0 : index
    %c7_71 = arith.constant 7 : index
    %c0_72 = arith.constant 0 : index
    %301 = vector.load %arg3[%c0_70, %c7_71, %c0_72] : memref<1x19x256xf32, #tpu.memory_space<vmem>>, vector<1x1x256xf32>
    %302 = vector.shape_cast %301 : vector<1x1x256xf32> to vector<1x256xf32>
    %c0_73 = arith.constant 0 : index
    %c0_74 = arith.constant 0 : index
    %c0_75 = arith.constant 0 : index
    %303 = vector.load %arg8[%c0_73, %c0_74, %c0_75] : memref<1x12x256xf32, #tpu.memory_space<vmem>>, vector<1x1x256xf32>
    %304 = vector.shape_cast %303 : vector<1x1x256xf32> to vector<1x256xf32>
    %305 = vector.shape_cast %302 : vector<1x256xf32> to vector<1x1x256xf32>
    tpu.vector_store %arg8[%c0_73, %c0_74, %c0_75], %305 {strides = array<i32>} : memref<1x12x256xf32, #tpu.memory_space<vmem>>, vector<1x1x256xf32>,
    %c0_76 = arith.constant 0 : index
    %c8_77 = arith.constant 8 : index
    %c0_78 = arith.constant 0 : index
    %306 = vector.load %arg3[%c0_76, %c8_77, %c0_78] : memref<1x19x256xf32, #tpu.memory_space<vmem>>, vector<1x1x256xf32>
    %307 = vector.shape_cast %306 : vector<1x1x256xf32> to vector<1x256xf32>
    %c0_79 = arith.constant 0 : index
    %c9 = arith.constant 9 : index
    %c0_80 = arith.constant 0 : index
    %308 = vector.load %arg3[%c0_79, %c9, %c0_80] : memref<1x19x256xf32, #tpu.memory_space<vmem>>, vector<1x1x256xf32>
    %309 = vector.shape_cast %308 : vector<1x1x256xf32> to vector<1x256xf32>
    %c0_81 = arith.constant 0 : index
    %c10 = arith.constant 10 : index
    %c0_82 = arith.constant 0 : index
    %310 = vector.load %arg3[%c0_81, %c10, %c0_82] : memref<1x19x256xf32, #tpu.memory_space<vmem>>, vector<1x1x256xf32>
    %311 = vector.shape_cast %310 : vector<1x1x256xf32> to vector<1x256xf32>
    %312 = vector.broadcast %110 : f32 to vector<1x256xf32>
    %313 = arith.mulf %312, %307 : vector<1x256xf32>
    %314 = vector.broadcast %114 : f32 to vector<1x256xf32>
    %315 = arith.mulf %314, %309 : vector<1x256xf32>
    %316 = arith.addf %313, %315 : vector<1x256xf32>
    %317 = vector.broadcast %106 : f32 to vector<1x256xf32>
    %318 = arith.mulf %317, %311 : vector<1x256xf32>
    %319 = arith.addf %316, %318 : vector<1x256xf32>
    %cst_83 = arith.constant 2.500000e-02 : f32
    %320 = vector.broadcast %cst_83 : f32 to vector<1x256xf32>
    %321 = arith.mulf %320, %319 : vector<1x256xf32>
    %c0_84 = arith.constant 0 : index
    %c1_85 = arith.constant 1 : index
    %c0_86 = arith.constant 0 : index
    %322 = vector.load %arg8[%c0_84, %c1_85, %c0_86] : memref<1x12x256xf32, #tpu.memory_space<vmem>>, vector<1x1x256xf32>
    %323 = vector.shape_cast %322 : vector<1x1x256xf32> to vector<1x256xf32>
    %324 = vector.shape_cast %321 : vector<1x256xf32> to vector<1x1x256xf32>
    tpu.vector_store %arg8[%c0_84, %c1_85, %c0_86], %324 {strides = array<i32>} : memref<1x12x256xf32, #tpu.memory_space<vmem>>, vector<1x1x256xf32>,
    %325 = vector.broadcast %122 : f32 to vector<1x256xf32>
    %326 = arith.mulf %325, %307 : vector<1x256xf32>
    %327 = vector.broadcast %126 : f32 to vector<1x256xf32>
    %328 = arith.mulf %327, %309 : vector<1x256xf32>
    %329 = arith.addf %326, %328 : vector<1x256xf32>
    %330 = vector.broadcast %118 : f32 to vector<1x256xf32>
    %331 = arith.mulf %330, %311 : vector<1x256xf32>
    %332 = arith.addf %329, %331 : vector<1x256xf32>
    %cst_87 = arith.constant 2.500000e-02 : f32
    %333 = vector.broadcast %cst_87 : f32 to vector<1x256xf32>
    %334 = arith.mulf %333, %332 : vector<1x256xf32>
    %c0_88 = arith.constant 0 : index
    %c2_89 = arith.constant 2 : index
    %c0_90 = arith.constant 0 : index
    %335 = vector.load %arg8[%c0_88, %c2_89, %c0_90] : memref<1x12x256xf32, #tpu.memory_space<vmem>>, vector<1x1x256xf32>
    %336 = vector.shape_cast %335 : vector<1x1x256xf32> to vector<1x256xf32>
    %337 = vector.shape_cast %334 : vector<1x256xf32> to vector<1x1x256xf32>
    tpu.vector_store %arg8[%c0_88, %c2_89, %c0_90], %337 {strides = array<i32>} : memref<1x12x256xf32, #tpu.memory_space<vmem>>, vector<1x1x256xf32>,
    %338 = vector.broadcast %98 : f32 to vector<1x256xf32>
    %339 = arith.mulf %338, %307 : vector<1x256xf32>
    %340 = vector.broadcast %102 : f32 to vector<1x256xf32>
    %341 = arith.mulf %340, %309 : vector<1x256xf32>
    %342 = arith.addf %339, %341 : vector<1x256xf32>
    %343 = vector.broadcast %94 : f32 to vector<1x256xf32>
    %344 = arith.mulf %343, %311 : vector<1x256xf32>
    %345 = arith.addf %342, %344 : vector<1x256xf32>
    %cst_91 = arith.constant 2.500000e-02 : f32
    %346 = vector.broadcast %cst_91 : f32 to vector<1x256xf32>
    %347 = arith.mulf %346, %345 : vector<1x256xf32>
    %c0_92 = arith.constant 0 : index
    %c3_93 = arith.constant 3 : index
    %c0_94 = arith.constant 0 : index
    %348 = vector.load %arg8[%c0_92, %c3_93, %c0_94] : memref<1x12x256xf32, #tpu.memory_space<vmem>>, vector<1x1x256xf32>
    %349 = vector.shape_cast %348 : vector<1x1x256xf32> to vector<1x256xf32>
    %350 = vector.shape_cast %347 : vector<1x256xf32> to vector<1x1x256xf32>
    tpu.vector_store %arg8[%c0_92, %c3_93, %c0_94], %350 {strides = array<i32>} : memref<1x12x256xf32, #tpu.memory_space<vmem>>, vector<1x1x256xf32>,
    %c0_95 = arith.constant 0 : index
    %c11 = arith.constant 11 : index
    %c0_96 = arith.constant 0 : index
    %351 = vector.load %arg3[%c0_95, %c11, %c0_96] : memref<1x19x256xf32, #tpu.memory_space<vmem>>, vector<1x1x256xf32>
    %352 = vector.shape_cast %351 : vector<1x1x256xf32> to vector<1x256xf32>
    %c0_97 = arith.constant 0 : index
    %c4_98 = arith.constant 4 : index
    %c0_99 = arith.constant 0 : index
    %353 = vector.load %arg8[%c0_97, %c4_98, %c0_99] : memref<1x12x256xf32, #tpu.memory_space<vmem>>, vector<1x1x256xf32>
    %354 = vector.shape_cast %353 : vector<1x1x256xf32> to vector<1x256xf32>
    %355 = vector.shape_cast %352 : vector<1x256xf32> to vector<1x1x256xf32>
    tpu.vector_store %arg8[%c0_97, %c4_98, %c0_99], %355 {strides = array<i32>} : memref<1x12x256xf32, #tpu.memory_space<vmem>>, vector<1x1x256xf32>,
    %c0_100 = arith.constant 0 : index
    %c12 = arith.constant 12 : index
    %c0_101 = arith.constant 0 : index
    %356 = vector.load %arg3[%c0_100, %c12, %c0_101] : memref<1x19x256xf32, #tpu.memory_space<vmem>>, vector<1x1x256xf32>
    %357 = vector.shape_cast %356 : vector<1x1x256xf32> to vector<1x256xf32>
    %c0_102 = arith.constant 0 : index
    %c13 = arith.constant 13 : index
    %c0_103 = arith.constant 0 : index
    %358 = vector.load %arg3[%c0_102, %c13, %c0_103] : memref<1x19x256xf32, #tpu.memory_space<vmem>>, vector<1x1x256xf32>
    %359 = vector.shape_cast %358 : vector<1x1x256xf32> to vector<1x256xf32>
    %c0_104 = arith.constant 0 : index
    %c14 = arith.constant 14 : index
    %c0_105 = arith.constant 0 : index
    %360 = vector.load %arg3[%c0_104, %c14, %c0_105] : memref<1x19x256xf32, #tpu.memory_space<vmem>>, vector<1x1x256xf32>
    %361 = vector.shape_cast %360 : vector<1x1x256xf32> to vector<1x256xf32>
    %362 = vector.broadcast %110 : f32 to vector<1x256xf32>
    %363 = arith.mulf %362, %357 : vector<1x256xf32>
    %364 = vector.broadcast %114 : f32 to vector<1x256xf32>
    %365 = arith.mulf %364, %359 : vector<1x256xf32>
    %366 = arith.addf %363, %365 : vector<1x256xf32>
    %367 = vector.broadcast %106 : f32 to vector<1x256xf32>
    %368 = arith.mulf %367, %361 : vector<1x256xf32>
    %369 = arith.addf %366, %368 : vector<1x256xf32>
    %cst_106 = arith.constant 2.500000e-02 : f32
    %370 = vector.broadcast %cst_106 : f32 to vector<1x256xf32>
    %371 = arith.mulf %370, %369 : vector<1x256xf32>
    %c0_107 = arith.constant 0 : index
    %c5_108 = arith.constant 5 : index
    %c0_109 = arith.constant 0 : index
    %372 = vector.load %arg8[%c0_107, %c5_108, %c0_109] : memref<1x12x256xf32, #tpu.memory_space<vmem>>, vector<1x1x256xf32>
    %373 = vector.shape_cast %372 : vector<1x1x256xf32> to vector<1x256xf32>
    %374 = vector.shape_cast %371 : vector<1x256xf32> to vector<1x1x256xf32>
    tpu.vector_store %arg8[%c0_107, %c5_108, %c0_109], %374 {strides = array<i32>} : memref<1x12x256xf32, #tpu.memory_space<vmem>>, vector<1x1x256xf32>,
    %375 = vector.broadcast %122 : f32 to vector<1x256xf32>
    %376 = arith.mulf %375, %357 : vector<1x256xf32>
    %377 = vector.broadcast %126 : f32 to vector<1x256xf32>
    %378 = arith.mulf %377, %359 : vector<1x256xf32>
    %379 = arith.addf %376, %378 : vector<1x256xf32>
    %380 = vector.broadcast %118 : f32 to vector<1x256xf32>
    %381 = arith.mulf %380, %361 : vector<1x256xf32>
    %382 = arith.addf %379, %381 : vector<1x256xf32>
    %cst_110 = arith.constant 2.500000e-02 : f32
    %383 = vector.broadcast %cst_110 : f32 to vector<1x256xf32>
    %384 = arith.mulf %383, %382 : vector<1x256xf32>
    %c0_111 = arith.constant 0 : index
    %c6_112 = arith.constant 6 : index
    %c0_113 = arith.constant 0 : index
    %385 = vector.load %arg8[%c0_111, %c6_112, %c0_113] : memref<1x12x256xf32, #tpu.memory_space<vmem>>, vector<1x1x256xf32>
    %386 = vector.shape_cast %385 : vector<1x1x256xf32> to vector<1x256xf32>
    %387 = vector.shape_cast %384 : vector<1x256xf32> to vector<1x1x256xf32>
    tpu.vector_store %arg8[%c0_111, %c6_112, %c0_113], %387 {strides = array<i32>} : memref<1x12x256xf32, #tpu.memory_space<vmem>>, vector<1x1x256xf32>,
    %388 = vector.broadcast %98 : f32 to vector<1x256xf32>
    %389 = arith.mulf %388, %357 : vector<1x256xf32>
    %390 = vector.broadcast %102 : f32 to vector<1x256xf32>
    %391 = arith.mulf %390, %359 : vector<1x256xf32>
    %392 = arith.addf %389, %391 : vector<1x256xf32>
    %393 = vector.broadcast %94 : f32 to vector<1x256xf32>
    %394 = arith.mulf %393, %361 : vector<1x256xf32>
    %395 = arith.addf %392, %394 : vector<1x256xf32>
    %cst_114 = arith.constant 2.500000e-02 : f32
    %396 = vector.broadcast %cst_114 : f32 to vector<1x256xf32>
    %397 = arith.mulf %396, %395 : vector<1x256xf32>
    %c0_115 = arith.constant 0 : index
    %c7_116 = arith.constant 7 : index
    %c0_117 = arith.constant 0 : index
    %398 = vector.load %arg8[%c0_115, %c7_116, %c0_117] : memref<1x12x256xf32, #tpu.memory_space<vmem>>, vector<1x1x256xf32>
    %399 = vector.shape_cast %398 : vector<1x1x256xf32> to vector<1x256xf32>
    %400 = vector.shape_cast %397 : vector<1x256xf32> to vector<1x1x256xf32>
    tpu.vector_store %arg8[%c0_115, %c7_116, %c0_117], %400 {strides = array<i32>} : memref<1x12x256xf32, #tpu.memory_space<vmem>>, vector<1x1x256xf32>,
    %c0_118 = arith.constant 0 : index
    %c15 = arith.constant 15 : index
    %c0_119 = arith.constant 0 : index
    %401 = vector.load %arg3[%c0_118, %c15, %c0_119] : memref<1x19x256xf32, #tpu.memory_space<vmem>>, vector<1x1x256xf32>
    %402 = vector.shape_cast %401 : vector<1x1x256xf32> to vector<1x256xf32>
    %c0_120 = arith.constant 0 : index
    %c8_121 = arith.constant 8 : index
    %c0_122 = arith.constant 0 : index
    %403 = vector.load %arg8[%c0_120, %c8_121, %c0_122] : memref<1x12x256xf32, #tpu.memory_space<vmem>>, vector<1x1x256xf32>
    %404 = vector.shape_cast %403 : vector<1x1x256xf32> to vector<1x256xf32>
    %405 = vector.shape_cast %402 : vector<1x256xf32> to vector<1x1x256xf32>
    tpu.vector_store %arg8[%c0_120, %c8_121, %c0_122], %405 {strides = array<i32>} : memref<1x12x256xf32, #tpu.memory_space<vmem>>, vector<1x1x256xf32>,
    %c0_123 = arith.constant 0 : index
    %c16 = arith.constant 16 : index
    %c0_124 = arith.constant 0 : index
    %406 = vector.load %arg3[%c0_123, %c16, %c0_124] : memref<1x19x256xf32, #tpu.memory_space<vmem>>, vector<1x1x256xf32>
    %407 = vector.shape_cast %406 : vector<1x1x256xf32> to vector<1x256xf32>
    %c0_125 = arith.constant 0 : index
    %c17 = arith.constant 17 : index
    %c0_126 = arith.constant 0 : index
    %408 = vector.load %arg3[%c0_125, %c17, %c0_126] : memref<1x19x256xf32, #tpu.memory_space<vmem>>, vector<1x1x256xf32>
    %409 = vector.shape_cast %408 : vector<1x1x256xf32> to vector<1x256xf32>
    %c0_127 = arith.constant 0 : index
    %c18 = arith.constant 18 : index
    %c0_128 = arith.constant 0 : index
    %410 = vector.load %arg3[%c0_127, %c18, %c0_128] : memref<1x19x256xf32, #tpu.memory_space<vmem>>, vector<1x1x256xf32>
    %411 = vector.shape_cast %410 : vector<1x1x256xf32> to vector<1x256xf32>
    %412 = vector.broadcast %110 : f32 to vector<1x256xf32>
    %413 = arith.mulf %412, %407 : vector<1x256xf32>
    %414 = vector.broadcast %114 : f32 to vector<1x256xf32>
    %415 = arith.mulf %414, %409 : vector<1x256xf32>
    %416 = arith.addf %413, %415 : vector<1x256xf32>
    %417 = vector.broadcast %106 : f32 to vector<1x256xf32>
    %418 = arith.mulf %417, %411 : vector<1x256xf32>
    %419 = arith.addf %416, %418 : vector<1x256xf32>
    %cst_129 = arith.constant 2.500000e-02 : f32
    %420 = vector.broadcast %cst_129 : f32 to vector<1x256xf32>
    %421 = arith.mulf %420, %419 : vector<1x256xf32>
    %c0_130 = arith.constant 0 : index
    %c9_131 = arith.constant 9 : index
    %c0_132 = arith.constant 0 : index
    %422 = vector.load %arg8[%c0_130, %c9_131, %c0_132] : memref<1x12x256xf32, #tpu.memory_space<vmem>>, vector<1x1x256xf32>
    %423 = vector.shape_cast %422 : vector<1x1x256xf32> to vector<1x256xf32>
    %424 = vector.shape_cast %421 : vector<1x256xf32> to vector<1x1x256xf32>
    tpu.vector_store %arg8[%c0_130, %c9_131, %c0_132], %424 {strides = array<i32>} : memref<1x12x256xf32, #tpu.memory_space<vmem>>, vector<1x1x256xf32>,
    %425 = vector.broadcast %122 : f32 to vector<1x256xf32>
    %426 = arith.mulf %425, %407 : vector<1x256xf32>
    %427 = vector.broadcast %126 : f32 to vector<1x256xf32>
    %428 = arith.mulf %427, %409 : vector<1x256xf32>
    %429 = arith.addf %426, %428 : vector<1x256xf32>
    %430 = vector.broadcast %118 : f32 to vector<1x256xf32>
    %431 = arith.mulf %430, %411 : vector<1x256xf32>
    %432 = arith.addf %429, %431 : vector<1x256xf32>
    %cst_133 = arith.constant 2.500000e-02 : f32
    %433 = vector.broadcast %cst_133 : f32 to vector<1x256xf32>
    %434 = arith.mulf %433, %432 : vector<1x256xf32>
    %c0_134 = arith.constant 0 : index
    %c10_135 = arith.constant 10 : index
    %c0_136 = arith.constant 0 : index
    %435 = vector.load %arg8[%c0_134, %c10_135, %c0_136] : memref<1x12x256xf32, #tpu.memory_space<vmem>>, vector<1x1x256xf32>
    %436 = vector.shape_cast %435 : vector<1x1x256xf32> to vector<1x256xf32>
    %437 = vector.shape_cast %434 : vector<1x256xf32> to vector<1x1x256xf32>
    tpu.vector_store %arg8[%c0_134, %c10_135, %c0_136], %437 {strides = array<i32>} : memref<1x12x256xf32, #tpu.memory_space<vmem>>, vector<1x1x256xf32>,
    %438 = vector.broadcast %98 : f32 to vector<1x256xf32>
    %439 = arith.mulf %438, %407 : vector<1x256xf32>
    %440 = vector.broadcast %102 : f32 to vector<1x256xf32>
    %441 = arith.mulf %440, %409 : vector<1x256xf32>
    %442 = arith.addf %439, %441 : vector<1x256xf32>
    %443 = vector.broadcast %94 : f32 to vector<1x256xf32>
    %444 = arith.mulf %443, %411 : vector<1x256xf32>
    %445 = arith.addf %442, %444 : vector<1x256xf32>
    %cst_137 = arith.constant 2.500000e-02 : f32
    %446 = vector.broadcast %cst_137 : f32 to vector<1x256xf32>
    %447 = arith.mulf %446, %445 : vector<1x256xf32>
    %c0_138 = arith.constant 0 : index
    %c11_139 = arith.constant 11 : index
    %c0_140 = arith.constant 0 : index
    %448 = vector.load %arg8[%c0_138, %c11_139, %c0_140] : memref<1x12x256xf32, #tpu.memory_space<vmem>>, vector<1x1x256xf32>
    %449 = vector.shape_cast %448 : vector<1x1x256xf32> to vector<1x256xf32>
    %450 = vector.shape_cast %447 : vector<1x256xf32> to vector<1x1x256xf32>
    tpu.vector_store %arg8[%c0_138, %c11_139, %c0_140], %450 {strides = array<i32>} : memref<1x12x256xf32, #tpu.memory_space<vmem>>, vector<1x1x256xf32>,
    %c0_141 = arith.constant 0 : index
    %c0_142 = arith.constant 0 : index
    %451 = vector.load %arg5[%c0_141, %c0_142] : memref<3x256xf32, #tpu.memory_space<vmem>>, vector<3x256xf32>
    %452 = vector.extract_strided_slice %451 {offsets = [0, 0], sizes = [1, 256], strides = [1, 1]} : vector<3x256xf32> to vector<1x256xf32>
    %453 = arith.mulf %2, %452 : vector<1x256xf32>
    %454 = vector.extract_strided_slice %451 {offsets = [1, 0], sizes = [1, 256], strides = [1, 1]} : vector<3x256xf32> to vector<1x256xf32>
    %455 = arith.mulf %2, %454 : vector<1x256xf32>
    %456 = vector.extract_strided_slice %451 {offsets = [2, 0], sizes = [1, 256], strides = [1, 1]} : vector<3x256xf32> to vector<1x256xf32>
    %457 = arith.mulf %2, %456 : vector<1x256xf32>
    %458 = vector.broadcast %94 : f32 to vector<1x256xf32>
    %459 = arith.mulf %458, %453 : vector<1x256xf32>
    %460 = vector.broadcast %98 : f32 to vector<1x256xf32>
    %461 = arith.mulf %460, %455 : vector<1x256xf32>
    %462 = arith.addf %459, %461 : vector<1x256xf32>
    %463 = vector.broadcast %102 : f32 to vector<1x256xf32>
    %464 = arith.mulf %463, %457 : vector<1x256xf32>
    %465 = arith.addf %462, %464 : vector<1x256xf32>
    %466 = vector.broadcast %130 : f32 to vector<1x256xf32>
    %467 = arith.addf %465, %466 : vector<1x256xf32>
    %c0_143 = arith.constant 0 : index
    %c0_144 = arith.constant 0 : index
    %c0_145 = arith.constant 0 : index
    %468 = vector.load %arg6[%c0_143, %c0_144, %c0_145] : memref<1x3x256xf32, #tpu.memory_space<vmem>>, vector<1x1x256xf32>
    %469 = vector.shape_cast %468 : vector<1x1x256xf32> to vector<1x256xf32>
    %470 = vector.shape_cast %467 : vector<1x256xf32> to vector<1x1x256xf32>
    tpu.vector_store %arg6[%c0_143, %c0_144, %c0_145], %470 {strides = array<i32>} : memref<1x3x256xf32, #tpu.memory_space<vmem>>, vector<1x1x256xf32>,
    %471 = vector.broadcast %106 : f32 to vector<1x256xf32>
    %472 = arith.mulf %471, %453 : vector<1x256xf32>
    %473 = vector.broadcast %110 : f32 to vector<1x256xf32>
    %474 = arith.mulf %473, %455 : vector<1x256xf32>
    %475 = arith.addf %472, %474 : vector<1x256xf32>
    %476 = vector.broadcast %114 : f32 to vector<1x256xf32>
    %477 = arith.mulf %476, %457 : vector<1x256xf32>
    %478 = arith.addf %475, %477 : vector<1x256xf32>
    %479 = vector.broadcast %134 : f32 to vector<1x256xf32>
    %480 = arith.addf %478, %479 : vector<1x256xf32>
    %c0_146 = arith.constant 0 : index
    %c1_147 = arith.constant 1 : index
    %c0_148 = arith.constant 0 : index
    %481 = vector.load %arg6[%c0_146, %c1_147, %c0_148] : memref<1x3x256xf32, #tpu.memory_space<vmem>>, vector<1x1x256xf32>
    %482 = vector.shape_cast %481 : vector<1x1x256xf32> to vector<1x256xf32>
    %483 = vector.shape_cast %480 : vector<1x256xf32> to vector<1x1x256xf32>
    tpu.vector_store %arg6[%c0_146, %c1_147, %c0_148], %483 {strides = array<i32>} : memref<1x3x256xf32, #tpu.memory_space<vmem>>, vector<1x1x256xf32>,
    %484 = vector.broadcast %118 : f32 to vector<1x256xf32>
    %485 = arith.mulf %484, %453 : vector<1x256xf32>
    %486 = vector.broadcast %122 : f32 to vector<1x256xf32>
    %487 = arith.mulf %486, %455 : vector<1x256xf32>
    %488 = arith.addf %485, %487 : vector<1x256xf32>
    %489 = vector.broadcast %126 : f32 to vector<1x256xf32>
    %490 = arith.mulf %489, %457 : vector<1x256xf32>
    %491 = arith.addf %488, %490 : vector<1x256xf32>
    %492 = vector.broadcast %138 : f32 to vector<1x256xf32>
    %493 = arith.addf %491, %492 : vector<1x256xf32>
    %c0_149 = arith.constant 0 : index
    %c2_150 = arith.constant 2 : index
    %c0_151 = arith.constant 0 : index
    %494 = vector.load %arg6[%c0_149, %c2_150, %c0_151] : memref<1x3x256xf32, #tpu.memory_space<vmem>>, vector<1x1x256xf32>
    %495 = vector.shape_cast %494 : vector<1x1x256xf32> to vector<1x256xf32>
    %496 = vector.shape_cast %493 : vector<1x256xf32> to vector<1x1x256xf32>
    tpu.vector_store %arg6[%c0_149, %c2_150, %c0_151], %496 {strides = array<i32>} : memref<1x3x256xf32, #tpu.memory_space<vmem>>, vector<1x1x256xf32>,
    return
  }
  func.func @transform_0(%arg0: i32, %arg1: i32) -> i32 {
    %c0_i32 = arith.constant 0 : i32
    %c0_i32_0 = arith.constant 0 : i32
    return %c0_i32 : i32
  }
  func.func @transform_1(%arg0: i32, %arg1: i32) -> (i32, i32, i32) {
    %c0_i32 = arith.constant 0 : i32
    %c0_i32_0 = arith.constant 0 : i32
    return %arg0, %c0_i32, %arg1 : i32, i32, i32
  }
  func.func @transform_2(%arg0: i32, %arg1: i32) -> (i32, i32, i32) {
    %c0_i32 = arith.constant 0 : i32
    %c0_i32_0 = arith.constant 0 : i32
    return %arg0, %c0_i32, %arg1 : i32, i32, i32
  }
  func.func @transform_3(%arg0: i32, %arg1: i32) -> (i32, i32) {
    %c0_i32 = arith.constant 0 : i32
    %c0_i32_0 = arith.constant 0 : i32
    return %c0_i32, %arg1 : i32, i32
  }
  func.func @transform_4(%arg0: i32, %arg1: i32) -> (i32, i32, i32) {
    %c0_i32 = arith.constant 0 : i32
    %c0_i32_0 = arith.constant 0 : i32
    return %arg0, %c0_i32, %arg1 : i32, i32, i32
  }
  func.func @transform_5(%arg0: i32, %arg1: i32) -> (i32, i32, i32) {
    %c0_i32 = arith.constant 0 : i32
    %c0_i32_0 = arith.constant 0 : i32
    return %arg0, %c0_i32, %arg1 : i32, i32, i32
  }
  func.func @transform_6(%arg0: i32, %arg1: i32) -> (i32, i32, i32) {
    %c0_i32 = arith.constant 0 : i32
    %c0_i32_0 = arith.constant 0 : i32
    return %arg0, %c0_i32, %arg1 : i32, i32, i32
  }
  func.func @transform_7(%arg0: i32, %arg1: i32) -> (i32, i32, i32) {
    %c0_i32 = arith.constant 0 : i32
    %c0_i32_0 = arith.constant 0 : i32
    return %arg0, %c0_i32, %arg1 : i32, i32, i32
  }
  func.func @transform_8(%arg0: i32, %arg1: i32) -> (i32, i32, i32) {
    %c0_i32 = arith.constant 0 : i32
    %c0_i32_0 = arith.constant 0 : i32
    return %arg0, %c0_i32, %arg1 : i32, i32, i32
  }
}

</mosaic_0001>

<llo_original>
// kernel: tpu_custom_call.1
$region0: #{tpu_custom_call.1}
  #allocation0 [shape = 'u32[]', space=smem, size = 0x4, offset = 0x4, fixed_abs, tag = 'smem constant byte address 0x4 - core index']
  #allocation1 [shape = 'u32[72,128]{1,0:T(1,128)}', space=vmem, size = 0x9000, scoped, tag = 'internal scratch']
  %s0 = inlined_call_operand.vmem [shape: f32[64], index: 0, kind: input, shape index: {}]
  %s1 = inlined_call_operand.vmem [shape: f32[4,19,256], index: 1, kind: input, shape index: {}]
  %s2 = inlined_call_operand.vmem [shape: f32[4,1,256], index: 2, kind: input, shape index: {}]
  %s3 = inlined_call_operand.vmem [shape: f32[3,256], index: 3, kind: input, shape index: {}]
  %s4 = inlined_call_operand.vmem [shape: f32[4,3,256], index: 4, kind: output, shape index: {0}]
  %s5 = inlined_call_operand.vmem [shape: f32[4,9,256], index: 5, kind: output, shape index: {1}]
  %s6 = inlined_call_operand.vmem [shape: f32[4,12,256], index: 6, kind: output, shape index: {2}]
  %s7 = inlined_call_operand.vmem [shape: f32[4,3,256], index: 7, kind: output, shape index: {3}]
  %s8 = inlined_call_operand.hbm [shape: f32[4,4,256], index: 8, kind: output, shape index: {4}]
  %9 = xla_tuple %s4, %s5, %s6, %s7, %s8
  %s10 = sld [smem:[#allocation0]]
  $region85: #{tpu_custom_call.1} parent=0
    _
  %s12 = ssub.s32 1, %s10
  %s13 = scalar_select 0, %s12, %s10
  $region1: #{tpu_custom_call.1} parent=0
    #allocation2 [shape = 'u8[512]{0}', space=smem, size = 0x200, scoped, tag = 'input window, operand 0, single buffered']
    #allocation3 [shape = 's32[2]{0}', space=sflag, size = 0x8, scoped, tag = 'scoped memory for tpu_custom_call.1']
    #allocation4 [shape = 's32[2]{0}', space=sflag, size = 0x8, scoped, tag = 'scoped memory for tpu_custom_call.1']
    #allocation5 [shape = 'u8[8192]{0}', space=vmem, size = 0x2000, scoped, tag = 'output window, operand 4']
    %14 = vsyncpa [#allocation4], 0
    %15 = vsyncpa [#allocation3], 0
    %s16 = scalar_lea.sflag [#allocation3], 1
    %17 = vsyncpa %s16, 0
    loop: start=0, step=1, limit=6
    $region2: #{tpu_custom_call.1} parent=1 // loop_pre_header
      _
    $region3: #{tpu_custom_call.1} parent=1 // loop_header
      %s19 = sphi 0, %s23
      %p20 = scmp.ge.s32.totalorder %s19, 6
      %s26 = sphi 0, %s38
      %s27 = sphi 0, %s34
      %s28 = sphi 0, %s26
      %s29 = sphi 0, %s27
      %s30 = sphi 0, %s28
      %s31 = sphi 0, %s29
      %s39 = sphi 0, %s39
      %s41 = sphi 0, %s39
      %s42 = sphi 0, %s41
      %s56 = sphi 0, %s42
      %s64 = sphi 0, %s66
      %s67 = sphi 0, %s64
      %s68 = sphi 0, %s67
      %s84 = sphi 0, %s68
      %s92 = sphi 0, %s94
      %s95 = sphi 0, %s92
      %s96 = sphi 0, %s95
      %s112 = sphi 0, %s96
      %s118 = sphi 0, %s120
      %s121 = sphi 0, %s118
      %s122 = sphi 0, %s121
      %s138 = sphi 0, %s122
      %s146 = sphi 0, %s148
      %s149 = sphi 0, %s146
      %s150 = sphi 0, %s149
      %s166 = sphi 0, %s150
      %s174 = sphi 0, %s176
      %s177 = sphi 0, %s174
      %s178 = sphi 0, %s177
      %s194 = sphi 0, %s178
      %s202 = sphi 0, %s204
      %s205 = sphi 0, %s202
      %s206 = sphi 0, %s205
      %s222 = sphi 0, %s206
      %s230 = sphi 0, %s232
      %s233 = sphi 0, %s230
      %s234 = sphi 0, %s233
      %s250 = sphi 0, %s234
      %s258 = sphi 0, %s260
      %s261 = sphi 0, %s258
      %s262 = sphi 0, %s261
      %s278 = sphi 0, %s262
    $region4: #{tpu_custom_call.1} parent=1 // loop_header_branch
      %22 = sbr.rel (%p20) target = $region8
    $region5: #{tpu_custom_call.1} parent=1 // loop_body
      %s24 = ssub.s32 %s19, 1
      %s25 = ssub.s32 %s19, 2
      %s32 = sadd.s32 1, %s27
      %p33 = scmp.ge.s32.totalorder %s32, 1
      %s34 = scalar_select %p33, 0, %s32
      %s35 = sadd.s32 1, %s26
      %s36 = scalar_select %p33, %s35, %s26
      %p37 = scmp.ge.s32.totalorder %s36, 4
      %s38 = scalar_select %p37, 0, %s36
      %s40 = sadd.s32 %s39, 1
      %p43 = scmp.eq.s32.totalorder %s19, 3
      %p44 = scmp.ne.s32.totalorder %s39, %s41
      %p45 = scmp.eq.s32.totalorder %s19, 0
      %p46 = por %p44, %p45
      %p47 = scmp.ne.s32.totalorder %s39, %s41
      %p48 = scmp.eq.s32.totalorder %s24, 3
      %p49 = por %p47, %p48
      %p50 = scmp.ne.s32.totalorder %s41, %s42
      %p51 = scmp.eq.s32.totalorder %s24, 0
      %p52 = por %p50, %p51
      %p53 = scmp.ne.s32.totalorder %s41, %s42
      %p54 = scmp.eq.s32.totalorder %s25, 3
      %p55 = por %p53, %p54
      %p57 = scmp.ne.s32.totalorder %s42, %s56
      %p58 = scmp.eq.s32.totalorder %s25, 0
      %p59 = por %p57, %p58
      %s60 = ssub.s32 %s26, %s38
      %s61 = ssub.s32 %s27, %s34
      %s62 = sor.u32 %s60, %s61
      %p63 = scmp.eq.s32.totalorder %s62, 0
      %s65 = sadd.s32 %s64, 1
      %s66 = scalar_select %p63, %s64, %s65
      %p69 = pneg %p63
      %p70 = scmp.eq.s32.totalorder %s19, 3
      %p71 = por %p69, %p70
      %p72 = scmp.ne.s32.totalorder %s64, %s67
      %p73 = scmp.eq.s32.totalorder %s19, 0
      %p74 = por %p72, %p73
      %p75 = scmp.ne.s32.totalorder %s64, %s67
      %p76 = scmp.eq.s32.totalorder %s24, 3
      %p77 = por %p75, %p76
      %p78 = scmp.ne.s32.totalorder %s67, %s68
      %p79 = scmp.eq.s32.totalorder %s24, 0
      %p80 = por %p78, %p79
      %p81 = scmp.ne.s32.totalorder %s67, %s68
      %p82 = scmp.eq.s32.totalorder %s25, 3
      %p83 = por %p81, %p82
      %p85 = scmp.ne.s32.totalorder %s68, %s84
      %p86 = scmp.eq.s32.totalorder %s25, 0
      %p87 = por %p85, %p86
      %s88 = ssub.s32 %s26, %s38
      %s89 = ssub.s32 %s27, %s34
      %s90 = sor.u32 %s88, %s89
      %p91 = scmp.eq.s32.totalorder %s90, 0
      %s93 = sadd.s32 %s92, 1
      %s94 = scalar_select %p91, %s92, %s93
      %p97 = pneg %p91
      %p98 = scmp.eq.s32.totalorder %s19, 3
      %p99 = por %p97, %p98
      %p100 = scmp.ne.s32.totalorder %s92, %s95
      %p101 = scmp.eq.s32.totalorder %s19, 0
      %p102 = por %p100, %p101
      %p103 = scmp.ne.s32.totalorder %s92, %s95
      %p104 = scmp.eq.s32.totalorder %s24, 3
      %p105 = por %p103, %p104
      %p106 = scmp.ne.s32.totalorder %s95, %s96
      %p107 = scmp.eq.s32.totalorder %s24, 0
      %p108 = por %p106, %p107
      %p109 = scmp.ne.s32.totalorder %s95, %s96
      %p110 = scmp.eq.s32.totalorder %s25, 3
      %p111 = por %p109, %p110
      %p113 = scmp.ne.s32.totalorder %s96, %s112
      %p114 = scmp.eq.s32.totalorder %s25, 0
      %p115 = por %p113, %p114
      %s116 = ssub.s32 %s27, %s34
      %p117 = scmp.eq.s32.totalorder %s116, 0
      %s119 = sadd.s32 %s118, 1
      %s120 = scalar_select %p117, %s118, %s119
      %p123 = pneg %p117
      %p124 = scmp.eq.s32.totalorder %s19, 3
      %p125 = por %p123, %p124
      %p126 = scmp.ne.s32.totalorder %s118, %s121
      %p127 = scmp.eq.s32.totalorder %s19, 0
      %p128 = por %p126, %p127
      %p129 = scmp.ne.s32.totalorder %s118, %s121
      %p130 = scmp.eq.s32.totalorder %s24, 3
      %p131 = por %p129, %p130
      %p132 = scmp.ne.s32.totalorder %s121, %s122
      %p133 = scmp.eq.s32.totalorder %s24, 0
      %p134 = por %p132, %p133
      %p135 = scmp.ne.s32.totalorder %s121, %s122
      %p136 = scmp.eq.s32.totalorder %s25, 3
      %p137 = por %p135, %p136
      %p139 = scmp.ne.s32.totalorder %s122, %s138
      %p140 = scmp.eq.s32.totalorder %s25, 0
      %p141 = por %p139, %p140
      %s142 = ssub.s32 %s26, %s38
      %s143 = ssub.s32 %s27, %s34
      %s144 = sor.u32 %s142, %s143
      %p145 = scmp.eq.s32.totalorder %s144, 0
      %s147 = sadd.s32 %s146, 1
      %s148 = scalar_select %p145, %s146, %s147
      %p151 = pneg %p145
      %p152 = scmp.eq.s32.totalorder %s19, 3
      %p153 = por %p151, %p152
      %p154 = scmp.ne.s32.totalorder %s146, %s149
      %p155 = scmp.eq.s32.totalorder %s19, 0
      %p156 = por %p154, %p155
      %p157 = scmp.ne.s32.totalorder %s146, %s149
      %p158 = scmp.eq.s32.totalorder %s24, 3
      %p159 = por %p157, %p158
      %p160 = scmp.ne.s32.totalorder %s149, %s150
      %p161 = scmp.eq.s32.totalorder %s24, 0
      %p162 = por %p160, %p161
      %p163 = scmp.ne.s32.totalorder %s149, %s150
      %p164 = scmp.eq.s32.totalorder %s25, 3
      %p165 = por %p163, %p164
      %p167 = scmp.ne.s32.totalorder %s150, %s166
      %p168 = scmp.eq.s32.totalorder %s25, 0
      %p169 = por %p167, %p168
      %s170 = ssub.s32 %s26, %s38
      %s171 = ssub.s32 %s27, %s34
      %s172 = sor.u32 %s170, %s171
      %p173 = scmp.eq.s32.totalorder %s172, 0
      %s175 = sadd.s32 %s174, 1
      %s176 = scalar_select %p173, %s174, %s175
      %p179 = pneg %p173
      %p180 = scmp.eq.s32.totalorder %s19, 3
      %p181 = por %p179, %p180
      %p182 = scmp.ne.s32.totalorder %s174, %s177
      %p183 = scmp.eq.s32.totalorder %s19, 0
      %p184 = por %p182, %p183
      %p185 = scmp.ne.s32.totalorder %s174, %s177
      %p186 = scmp.eq.s32.totalorder %s24, 3
      %p187 = por %p185, %p186
      %p188 = scmp.ne.s32.totalorder %s177, %s178
      %p189 = scmp.eq.s32.totalorder %s24, 0
      %p190 = por %p188, %p189
      %p191 = scmp.ne.s32.totalorder %s177, %s178
      %p192 = scmp.eq.s32.totalorder %s25, 3
      %p193 = por %p191, %p192
      %p195 = scmp.ne.s32.totalorder %s178, %s194
      %p196 = scmp.eq.s32.totalorder %s25, 0
      %p197 = por %p195, %p196
      %s198 = ssub.s32 %s26, %s38
      %s199 = ssub.s32 %s27, %s34
      %s200 = sor.u32 %s198, %s199
      %p201 = scmp.eq.s32.totalorder %s200, 0
      %s203 = sadd.s32 %s202, 1
      %s204 = scalar_select %p201, %s202, %s203
      %p207 = pneg %p201
      %p208 = scmp.eq.s32.totalorder %s19, 3
      %p209 = por %p207, %p208
      %p210 = scmp.ne.s32.totalorder %s202, %s205
      %p211 = scmp.eq.s32.totalorder %s19, 0
      %p212 = por %p210, %p211
      %p213 = scmp.ne.s32.totalorder %s202, %s205
      %p214 = scmp.eq.s32.totalorder %s24, 3
      %p215 = por %p213, %p214
      %p216 = scmp.ne.s32.totalorder %s205, %s206
      %p217 = scmp.eq.s32.totalorder %s24, 0
      %p218 = por %p216, %p217
      %p219 = scmp.ne.s32.totalorder %s205, %s206
      %p220 = scmp.eq.s32.totalorder %s25, 3
      %p221 = por %p219, %p220
      %p223 = scmp.ne.s32.totalorder %s206, %s222
      %p224 = scmp.eq.s32.totalorder %s25, 0
      %p225 = por %p223, %p224
      %s226 = ssub.s32 %s26, %s38
      %s227 = ssub.s32 %s27, %s34
      %s228 = sor.u32 %s226, %s227
      %p229 = scmp.eq.s32.totalorder %s228, 0
      %s231 = sadd.s32 %s230, 1
      %s232 = scalar_select %p229, %s230, %s231
      %p235 = pneg %p229
      %p236 = scmp.eq.s32.totalorder %s19, 3
      %p237 = por %p235, %p236
      %p238 = scmp.ne.s32.totalorder %s230, %s233
      %p239 = scmp.eq.s32.totalorder %s19, 0
      %p240 = por %p238, %p239
      %p241 = scmp.ne.s32.totalorder %s230, %s233
      %p242 = scmp.eq.s32.totalorder %s24, 3
      %p243 = por %p241, %p242
      %p244 = scmp.ne.s32.totalorder %s233, %s234
      %p245 = scmp.eq.s32.totalorder %s24, 0
      %p246 = por %p244, %p245
      %p247 = scmp.ne.s32.totalorder %s233, %s234
      %p248 = scmp.eq.s32.totalorder %s25, 3
      %p249 = por %p247, %p248
      %p251 = scmp.ne.s32.totalorder %s234, %s250
      %p252 = scmp.eq.s32.totalorder %s25, 0
      %p253 = por %p251, %p252
      %s254 = ssub.s32 %s26, %s38
      %s255 = ssub.s32 %s27, %s34
      %s256 = sor.u32 %s254, %s255
      %p257 = scmp.eq.s32.totalorder %s256, 0
      %s259 = sadd.s32 %s258, 1
      %s260 = scalar_select %p257, %s258, %s259
      %p263 = pneg %p257
      %p264 = scmp.eq.s32.totalorder %s19, 3
      %p265 = por %p263, %p264
      %p266 = scmp.ne.s32.totalorder %s258, %s261
      %p267 = scmp.eq.s32.totalorder %s19, 0
      %p268 = por %p266, %p267
      %p269 = scmp.ne.s32.totalorder %s258, %s261
      %p270 = scmp.eq.s32.totalorder %s24, 3
      %p271 = por %p269, %p270
      %p272 = scmp.ne.s32.totalorder %s261, %s262
      %p273 = scmp.eq.s32.totalorder %s24, 0
      %p274 = por %p272, %p273
      %p275 = scmp.ne.s32.totalorder %s261, %s262
      %p276 = scmp.eq.s32.totalorder %s25, 3
      %p277 = por %p275, %p276
      %p279 = scmp.ne.s32.totalorder %s262, %s278
      %p280 = scmp.eq.s32.totalorder %s25, 0
      %p281 = por %p279, %p280
      %p282 = scmp.le.s32.totalorder 1, %s19
      %p283 = scmp.lt.s32.totalorder %s19, 5
      %p284 = pnand %p282, %p283
      %p285 = pneg %p284
      // Predicated region
      $region9: #{tpu_custom_call.1} parent=5 // pred_check
        _
      $region10: #{tpu_custom_call.1} parent=5 // pred_check_branch
        %287 = sbr.rel (%p284) target = $region12
      $region11: #{tpu_custom_call.1} parent=5 // pred_region
        %s288 = ssub.s32 %s19, 1
        // Predicated region
        $region13: #{tpu_custom_call.1} parent=11 // pred_check
          %p289 = pneg %p52
        $region14: #{tpu_custom_call.1} parent=11 // pred_check_branch
          %291 = sbr.rel (%p289) target = $region16
        $region15: #{tpu_custom_call.1} parent=11 // pred_region
          %293 = vsyncadd [#allocation4], 0
          %s295 = sshll.u32 %s0, 4
          %s296 = int_to_ptr.vmem [resolvable:$true] %s295
          %298 = dma.vmem_to_smem %s296, 16, [#allocation2], [#allocation4]
        $region16: #{tpu_custom_call.1} parent=11 // pred_fallthru
          _
        // Predicated region
        $region17: #{tpu_custom_call.1} parent=11 // pred_check
          %p299 = pneg %p134
        $region18: #{tpu_custom_call.1} parent=11 // pred_check_branch
          %301 = sbr.rel (%p299) target = $region20
        $region19: #{tpu_custom_call.1} parent=11 // pred_region
          %s302 = smul.u32 2, %s29
          %p303 = scmp.lt.s32.totalorder %s302, 1
          %s304 = scalar_select %p303, %s302, 1
          %s305 = smul.addr %s304, 4
          %s306 = scalar_lea.vmem %s3, %s305
          %s307 = smul.u32 2, %s29
        $region20: #{tpu_custom_call.1} parent=11 // pred_fallthru
          _
      $region12: #{tpu_custom_call.1} parent=5 // pred_fallthru
        _
      %p308 = scmp.lt.s32.totalorder %s19, 4
      // Predicated region
      $region21: #{tpu_custom_call.1} parent=5 // pred_check
        %p309 = pneg %p308
      $region22: #{tpu_custom_call.1} parent=5 // pred_check_branch
        %311 = sbr.rel (%p309) target = $region24
      $region23: #{tpu_custom_call.1} parent=5 // pred_region
        // Predicated region
        $region25: #{tpu_custom_call.1} parent=23 // pred_check
          %p312 = pneg %p74
        $region26: #{tpu_custom_call.1} parent=23 // pred_check_branch
          %314 = sbr.rel (%p312) target = $region28
        $region27: #{tpu_custom_call.1} parent=23 // pred_region
          %s315 = smul.u32 2, %s27
          %p316 = scmp.lt.s32.totalorder %s26, 3
          %s317 = scalar_select %p316, %s26, 3
          %p318 = scmp.lt.s32.totalorder %s315, 1
          %s319 = scalar_select %p318, %s315, 1
          %s320 = smul.addr %s317, 6
          %s321 = sadd.s32 %s319, %s320
          %s322 = smul.addr %s321, 8
          %s323 = scalar_lea.vmem %s1, %s322
          %s324 = smul.u32 2, %s27
        $region28: #{tpu_custom_call.1} parent=23 // pred_fallthru
          _
        // Predicated region
        $region29: #{tpu_custom_call.1} parent=23 // pred_check
          %p325 = pneg %p102
        $region30: #{tpu_custom_call.1} parent=23 // pred_check_branch
          %327 = sbr.rel (%p325) target = $region32
        $region31: #{tpu_custom_call.1} parent=23 // pred_region
          %s328 = smul.u32 2, %s27
          %p329 = scmp.lt.s32.totalorder %s26, 3
          %s330 = scalar_select %p329, %s26, 3
          %p331 = scmp.lt.s32.totalorder %s328, 1
          %s332 = scalar_select %p331, %s328, 1
          %s333 = smul.addr %s330, 2
          %s334 = sadd.s32 %s332, %s333
          %s335 = scalar_lea.vmem %s2, %s334
          %s336 = smul.u32 2, %s27
        $region32: #{tpu_custom_call.1} parent=23 // pred_fallthru
          _
      $region24: #{tpu_custom_call.1} parent=5 // pred_fallthru
        _
      %p337 = scmp.le.s32.totalorder 1, %s19
      %p338 = scmp.lt.s32.totalorder %s19, 5
      %p339 = pnand %p337, %p338
      %p340 = pneg %p339
      // Predicated region
      $region33: #{tpu_custom_call.1} parent=5 // pred_check
        _
      $region34: #{tpu_custom_call.1} parent=5 // pred_check_branch
        %342 = sbr.rel (%p339) target = $region36
      $region35: #{tpu_custom_call.1} parent=5 // pred_region
        %s343 = ssub.s32 %s19, 1
        // Predicated region
        $region37: #{tpu_custom_call.1} parent=35 // pred_check
          %p344 = pneg %p52
        $region38: #{tpu_custom_call.1} parent=35 // pred_check_branch
          %346 = sbr.rel (%p344) target = $region40
        $region39: #{tpu_custom_call.1} parent=35 // pred_region
          %348 = dma.done [#allocation4], 16
        $region40: #{tpu_custom_call.1} parent=35 // pred_fallthru
          _
        %349 = sfence
        %p350 = pneg %p52
        %p351 = pneg %p49
        %s352 = smul.u32 2, %s29
        %p353 = scmp.lt.s32.totalorder %s28, 3
        %s354 = scalar_select %p353, %s28, 3
        %p355 = scmp.lt.s32.totalorder %s352, 1
        %s356 = scalar_select %p355, %s352, 1
        %s357 = smul.addr %s354, 6
        %s358 = sadd.s32 %s356, %s357
        %s359 = smul.addr %s358, 8
        %s360 = scalar_lea.vmem %s1, %s359
        %p361 = pneg %p80
        %p362 = pneg %p77
        %s363 = smul.u32 2, %s29
        %p364 = scmp.lt.s32.totalorder %s28, 3
        %s365 = scalar_select %p364, %s28, 3
        %p366 = scmp.lt.s32.totalorder %s363, 1
        %s367 = scalar_select %p366, %s363, 1
        %s368 = smul.addr %s365, 2
        %s369 = sadd.s32 %s367, %s368
        %s370 = scalar_lea.vmem %s2, %s369
        %p371 = pneg %p108
        %p372 = pneg %p105
        %s373 = smul.u32 2, %s29
        %p374 = scmp.lt.s32.totalorder %s373, 1
        %s375 = scalar_select %p374, %s373, 1
        %s376 = smul.addr %s375, 4
        %s377 = scalar_lea.vmem %s3, %s376
        %p378 = pneg %p134
        %p379 = pneg %p131
        %p380 = pneg %p162
        %p381 = pneg %p159
        %s382 = smul.u32 2, %s29
        %p383 = scmp.lt.s32.totalorder %s28, 3
        %s384 = scalar_select %p383, %s28, 3
        %p385 = scmp.lt.s32.totalorder %s382, 1
        %s386 = scalar_select %p385, %s382, 1
        %s387 = smul.addr %s384, 2
        %s388 = sadd.s32 %s386, %s387
        %s389 = smul.addr %s388, 4
        %s390 = scalar_lea.vmem %s4, %s389
        %p391 = pneg %p190
        %p392 = pneg %p187
        %s393 = smul.u32 2, %s29
        %p394 = scmp.lt.s32.totalorder %s28, 3
        %s395 = scalar_select %p394, %s28, 3
        %p396 = scmp.lt.s32.totalorder %s393, 1
        %s397 = scalar_select %p396, %s393, 1
        %s398 = smul.addr %s395, 4
        %s399 = sadd.s32 %s397, %s398
        %s400 = smul.addr %s399, 8
        %s401 = scalar_lea.vmem %s5, %s400
        %p402 = pneg %p218
        %p403 = pneg %p215
        %s404 = smul.u32 2, %s29
        %p405 = scmp.lt.s32.totalorder %s28, 3
        %s406 = scalar_select %p405, %s28, 3
        %p407 = scmp.lt.s32.totalorder %s404, 1
        %s408 = scalar_select %p407, %s404, 1
        %s409 = smul.addr %s406, 4
        %s410 = sadd.s32 %s408, %s409
        %s411 = smul.addr %s410, 8
        %s412 = scalar_lea.vmem %s6, %s411
        %p413 = pneg %p246
        %p414 = pneg %p243
        %s415 = smul.u32 2, %s29
        %p416 = scmp.lt.s32.totalorder %s28, 3
        %s417 = scalar_select %p416, %s28, 3
        %p418 = scmp.lt.s32.totalorder %s415, 1
        %s419 = scalar_select %p418, %s415, 1
        %s420 = smul.addr %s417, 2
        %s421 = sadd.s32 %s419, %s420
        %s422 = smul.addr %s421, 4
        %s423 = scalar_lea.vmem %s7, %s422
        %p424 = pneg %p274
        %p425 = pneg %p271
        %s426 = sand.u32 %s261, 1
        %s427 = scalar_lea.sflag [#allocation3], %s426
        %s428 = sand.u32 %s261, 1
        %s429 = smul.addr %s428, 8
        %s430 = scalar_lea.vmem [#allocation5], %s429
        %s431 = smul.u32 2, %s29
        %p432 = scmp.lt.s32.totalorder %s28, 3
        %s433 = scalar_select %p432, %s28, 3
        %p434 = scmp.lt.s32.totalorder %s431, 1
        %s435 = scalar_select %p434, %s431, 1
        %s436 = smul.addr %s433, 6
        %s437 = sadd.s32 %s435, %s436
        %s438 = smul.addr %s437, 8
        %s439 = scalar_lea.vmem %s1, %s438
        %s440 = smul.u32 2, %s29
        %s441 = smul.u32 2, %s29
        %p442 = scmp.lt.s32.totalorder %s28, 3
        %s443 = scalar_select %p442, %s28, 3
        %p444 = scmp.lt.s32.totalorder %s441, 1
        %s445 = scalar_select %p444, %s441, 1
        %s446 = smul.addr %s443, 2
        %s447 = sadd.s32 %s445, %s446
        %s448 = scalar_lea.vmem %s2, %s447
        %s449 = smul.u32 2, %s29
        %s450 = smul.u32 2, %s29
        %p451 = scmp.lt.s32.totalorder %s450, 1
        %s452 = scalar_select %p451, %s450, 1
        %s453 = smul.addr %s452, 4
        %s454 = scalar_lea.vmem %s3, %s453
        %s455 = smul.u32 2, %s29
        %s456 = smul.u32 2, %s29
        %p457 = scmp.lt.s32.totalorder %s28, 3
        %s458 = scalar_select %p457, %s28, 3
        %p459 = scmp.lt.s32.totalorder %s456, 1
        %s460 = scalar_select %p459, %s456, 1
        %s461 = smul.addr %s458, 2
        %s462 = sadd.s32 %s460, %s461
        %s463 = smul.addr %s462, 4
        %s464 = scalar_lea.vmem %s4, %s463
        %s465 = smul.u32 2, %s29
        %s466 = smul.u32 2, %s29
        %p467 = scmp.lt.s32.totalorder %s28, 3
        %s468 = scalar_select %p467, %s28, 3
        %p469 = scmp.lt.s32.totalorder %s466, 1
        %s470 = scalar_select %p469, %s466, 1
        %s471 = smul.addr %s468, 4
        %s472 = sadd.s32 %s470, %s471
        %s473 = smul.addr %s472, 8
        %s474 = scalar_lea.vmem %s5, %s473
        %s475 = smul.u32 2, %s29
        %s476 = smul.u32 2, %s29
        %p477 = scmp.lt.s32.totalorder %s28, 3
        %s478 = scalar_select %p477, %s28, 3
        %p479 = scmp.lt.s32.totalorder %s476, 1
        %s480 = scalar_select %p479, %s476, 1
        %s481 = smul.addr %s478, 4
        %s482 = sadd.s32 %s480, %s481
        %s483 = smul.addr %s482, 8
        %s484 = scalar_lea.vmem %s6, %s483
        %s485 = smul.u32 2, %s29
        %s486 = smul.u32 2, %s29
        %p487 = scmp.lt.s32.totalorder %s28, 3
        %s488 = scalar_select %p487, %s28, 3
        %p489 = scmp.lt.s32.totalorder %s486, 1
        %s490 = scalar_select %p489, %s486, 1
        %s491 = smul.addr %s488, 2
        %s492 = sadd.s32 %s490, %s491
        %s493 = smul.addr %s492, 4
        %s494 = scalar_lea.vmem %s7, %s493
        %s495 = smul.u32 2, %s29
        %s496 = smul.u32 2, %s29
        %s497 = smul.u32 %s28, 16
        %v498 = vld [vmem:[%s448] sm:$0x3]
        %v499 = vld [vmem:[%s439] sm:$0x7]
        %v500 = vld [vmem:[%s439 + $0x8] sm:$0x7]
        %v501 = vsub.f32 0.0, %v499
        %v502 = vsub.f32 0.0, %v500
        %v503 = vmul.f32 %v501, 1.442695
        %v504 = vpow.pop %v503
        %v505 = vmul.f32 %v502, 1.442695
        %v506 = vpow.pop %v505
        %v507 = vadd.f32 %v504, 1.0
        %v508 = vadd.f32 %v506, 1.0
        %v509 = vrcp.pop %v507
        %v510 = vmul.f32 %v507, %v509
        %v511 = vsub.f32 1.0, %v510
        %v512 = vmul.f32 %v509, %v511
        %v513 = vadd.f32 %v509, %v512
        %vm514 = vweird.f32 %v507
        %vm515 = vweird.f32 %v509
        %vm516 = vmor %vm514, %vm515
        %v517 = vsel %vm516, %v509, %v513
        %v518 = vand.u32 2147483647, %v507
        %vm519 = vcmp.eq.f32.partialorder %v518, 8.507059e+37
        %v520 = vand.u32 %v507, 2147483648
        %v521 = vor.u32 1.1754944e-38, %v520
        %v522 = vsel %vm519, %v521, %v517
        %v523 = vmul.f32 1.0, %v522
        %v524 = vrcp.pop %v508
        %v525 = vmul.f32 %v508, %v524
        %v526 = vsub.f32 1.0, %v525
        %v527 = vmul.f32 %v524, %v526
        %v528 = vadd.f32 %v524, %v527
        %vm529 = vweird.f32 %v508
        %vm530 = vweird.f32 %v524
        %vm531 = vmor %vm529, %vm530
        %v532 = vsel %vm531, %v524, %v528
        %v533 = vand.u32 2147483647, %v508
        %vm534 = vcmp.eq.f32.partialorder %v533, 8.507059e+37
        %v535 = vand.u32 %v508, 2147483648
        %v536 = vor.u32 1.1754944e-38, %v535
        %v537 = vsel %vm534, %v536, %v532
        %v538 = vmul.f32 1.0, %v537
        %v539 = vmul.f32 %v523, 14.5
        %v540 = vmul.f32 %v538, 14.5
        %v541 = vadd.f32 %v539, 0.5
        %v542 = vadd.f32 %v540, 0.5
        %v543 = vmul.f32 %v498, 0.0625
        %v545 = vperm.slane %v543, 0
        %v546 = vperm.slane %v543, 1
        %v549 = vmul.f32 %v541, %v545
        %v550 = vmul.f32 %v542, %v546
        %v553 = vrot.slane %v550, 4
        %vm554 = vcmask 1043456
        %v555 = vsel %vm554, %v549, %v553
        %557 = vst [vmem:[%s494] sm:$0x77] %v555
        %v558 = vld [vmem:[%s439] sm:$0x78]
        %v559 = vld [vmem:[%s439 + $0x8] sm:$0x78]
        %v560 = vmul.f32 %v558, %v558
        %v561 = vmul.f32 %v559, %v559
        %v564 = vrot.slane %v560, 3
        %v565 = vrot.slane %v561, 3
        %v568 = vsel %vm554, %v564, 0.0
        %v569 = vrot.slane %v568, 4
        %v570 = vadd.f32 %v568, %v569
        %v571 = vrot.slane %v570, 2
        %v572 = vadd.f32 %v570, %v571
        %v573 = vrot.slane %v572, 1
        %v574 = vadd.f32 %v572, %v573
        %v575 = vsel %vm554, %v565, 0.0
        %v576 = vrot.slane %v575, 4
        %v577 = vadd.f32 %v575, %v576
        %v578 = vrot.slane %v577, 2
        %v579 = vadd.f32 %v577, %v578
        %v580 = vrot.slane %v579, 1
        %v581 = vadd.f32 %v579, %v580
        %v582 = vadd.f32 %v574, 1e-16
        %v583 = vadd.f32 %v581, 1e-16
        %v584 = vrsqrt.pop %v582
        %v585 = vmul.f32 %v584, %v582
        %v586 = vmul.f32 %v585, %v584
        %v587 = vmul.f32 0.5, %v586
        %v588 = vsub.f32 1.5, %v587
        %v589 = vmul.f32 %v584, %v588
        %vm590 = vweird.f32 %v582
        %vm591 = vweird.f32 %v584
        %vm592 = vmor %vm590, %vm591
        %v593 = vsel %vm592, %v584, %v589
        %v594 = vrsqrt.pop %v583
        %v595 = vmul.f32 %v594, %v583
        %v596 = vmul.f32 %v595, %v594
        %v597 = vmul.f32 0.5, %v596
        %v598 = vsub.f32 1.5, %v597
        %v599 = vmul.f32 %v594, %v598
        %vm600 = vweird.f32 %v583
        %vm601 = vweird.f32 %v594
        %vm602 = vmor %vm600, %vm601
        %v603 = vsel %vm602, %v594, %v599
        %v604 = vmul.f32 %v558, %v593
        %v605 = vmul.f32 %v559, %v603
        %v608 = vrot.slane %v605, 4
        %v609 = vsel %vm554, %v604, %v608
        %v610 = vsel %vm554, %v608, %v604
        %v611 = vrot.slane %v610, 4
        %vm612 = vcmask 1040384
        %vm613 = vcmask 1044484
        %vm614 = vmor %vm612, %vm613
        %v615 = vrot.slane %v609, 7
        %v616 = vrot.slane %v615, 4
        %v617 = vrot.slane %v611, 7
        %v618 = vsel %vm614, %v616, %v617
        %620 = vst [vmem:[%s430] sm:$0xff] %v618
        %v621 = vmul.f32 %v604, %v604
        %v622 = vmul.f32 %v605, %v605
        %v625 = vrot.slane %v621, 1
        %v626 = vrot.slane %v622, 1
        %v629 = vadd.f32 %v621, %v625
        %v630 = vadd.f32 %v622, %v626
        %v631 = vmul.f32 %v629, 2.0
        %v632 = vmul.f32 %v630, 2.0
        %v633 = vsub.f32 1.0, %v631
        %v634 = vsub.f32 1.0, %v632
        %v635 = vrot.slane %v604, 1
        %v636 = vrot.slane %v605, 1
        %v639 = vmul.f32 %v604, %v635
        %v640 = vmul.f32 %v605, %v636
        %v641 = vrot.slane %v604, 3
        %v642 = vrot.slane %v605, 3
        %v645 = vmul.f32 %v604, %v641
        %v646 = vmul.f32 %v605, %v642
        %v649 = vrot.slane %v645, 7
        %v650 = vrot.slane %v646, 7
        %v653 = vsub.f32 %v639, %v649
        %v654 = vsub.f32 %v640, %v650
        %v655 = vmul.f32 %v653, 2.0
        %v656 = vmul.f32 %v654, 2.0
        %v657 = vrot.slane %v604, 2
        %v658 = vrot.slane %v605, 2
        %v661 = vmul.f32 %v604, %v657
        %v662 = vmul.f32 %v605, %v658
        %v665 = vrot.slane %v661, 7
        %v666 = vrot.slane %v662, 7
        %v669 = vadd.f32 %v661, %v665
        %v670 = vadd.f32 %v662, %v666
        %v671 = vmul.f32 %v669, 2.0
        %v672 = vmul.f32 %v670, 2.0
        %v673 = vadd.f32 %v639, %v649
        %v674 = vadd.f32 %v640, %v650
        %v675 = vmul.f32 %v673, 2.0
        %v676 = vmul.f32 %v674, 2.0
        %v677 = vrot.slane %v621, 2
        %v678 = vrot.slane %v622, 2
        %v681 = vadd.f32 %v621, %v677
        %v682 = vadd.f32 %v622, %v678
        %v683 = vmul.f32 %v681, 2.0
        %v684 = vmul.f32 %v682, 2.0
        %v685 = vsub.f32 1.0, %v683
        %v686 = vsub.f32 1.0, %v684
        %v689 = vrot.slane %v639, 6
        %v690 = vrot.slane %v640, 6
        %v693 = vsub.f32 %v639, %v689
        %v694 = vsub.f32 %v640, %v690
        %v695 = vmul.f32 %v693, 2.0
        %v696 = vmul.f32 %v694, 2.0
        %v697 = vsub.f32 %v661, %v665
        %v698 = vsub.f32 %v662, %v666
        %v699 = vmul.f32 %v697, 2.0
        %v700 = vmul.f32 %v698, 2.0
        %v701 = vadd.f32 %v639, %v689
        %v702 = vadd.f32 %v640, %v690
        %v703 = vmul.f32 %v701, 2.0
        %v704 = vmul.f32 %v702, 2.0
        %s705 = sld [smem:[#allocation2 + %s497]]
        %s706 = sadd.s32 %s497, 1
        %s707 = sld [smem:[#allocation2 + %s706]]
        %s708 = sadd.s32 %s497, 2
        %s709 = sld [smem:[#allocation2 + %s708]]
        %s710 = sadd.s32 %s497, 4
        %s711 = sld [smem:[#allocation2 + %s710]]
        %s712 = sadd.s32 %s497, 5
        %s713 = sld [smem:[#allocation2 + %s712]]
        %s714 = sadd.s32 %s497, 6
        %s715 = sld [smem:[#allocation2 + %s714]]
        %s716 = sadd.s32 %s497, 8
        %s717 = sld [smem:[#allocation2 + %s716]]
        %s718 = sadd.s32 %s497, 9
        %s719 = sld [smem:[#allocation2 + %s718]]
        %s720 = sadd.s32 %s497, 10
        %s721 = sld [smem:[#allocation2 + %s720]]
        %s722 = sadd.s32 %s497, 3
        %s723 = sld [smem:[#allocation2 + %s722]]
        %s724 = sadd.s32 %s497, 7
        %s725 = sld [smem:[#allocation2 + %s724]]
        %s726 = sadd.s32 %s497, 11
        %s727 = sld [smem:[#allocation2 + %s726]]
        %v728 = vstv %s705
        %v729 = vmul.f32 %v728, %v633
        %v730 = vmul.f32 %v728, %v634
        %v731 = vstv %s707
        %v732 = vmul.f32 %v731, %v675
        %v733 = vmul.f32 %v731, %v676
        %v736 = vrot.slane %v732, 7
        %v737 = vrot.slane %v733, 7
        %v740 = vadd.f32 %v729, %v736
        %v741 = vadd.f32 %v730, %v737
        %v742 = vstv %s709
        %v743 = vmul.f32 %v742, %v699
        %v744 = vmul.f32 %v742, %v700
        %v747 = vrot.slane %v743, 7
        %v748 = vrot.slane %v744, 7
        %v751 = vadd.f32 %v740, %v747
        %v752 = vadd.f32 %v741, %v748
        %v753 = vmul.f32 %v728, %v655
        %v754 = vmul.f32 %v728, %v656
        %v755 = vmul.f32 %v731, %v685
        %v756 = vmul.f32 %v731, %v686
        %v757 = vadd.f32 %v753, %v755
        %v758 = vadd.f32 %v754, %v756
        %v759 = vmul.f32 %v742, %v703
        %v760 = vmul.f32 %v742, %v704
        %v763 = vrot.slane %v759, 1
        %v764 = vrot.slane %v760, 1
        %v767 = vadd.f32 %v757, %v763
        %v768 = vadd.f32 %v758, %v764
        %v769 = vmul.f32 %v728, %v671
        %v770 = vmul.f32 %v728, %v672
        %v771 = vmul.f32 %v731, %v695
        %v772 = vmul.f32 %v731, %v696
        %v775 = vrot.slane %v771, 1
        %v776 = vrot.slane %v772, 1
        %v779 = vadd.f32 %v769, %v775
        %v780 = vadd.f32 %v770, %v776
        %v781 = vmul.f32 %v742, %v633
        %v782 = vmul.f32 %v742, %v634
        %v783 = vadd.f32 %v779, %v781
        %v784 = vadd.f32 %v780, %v782
        %v785 = vstv %s711
        %v786 = vmul.f32 %v785, %v633
        %v787 = vmul.f32 %v785, %v634
        %v788 = vstv %s713
        %v789 = vmul.f32 %v788, %v675
        %v790 = vmul.f32 %v788, %v676
        %v793 = vrot.slane %v789, 7
        %v794 = vrot.slane %v790, 7
        %v797 = vadd.f32 %v786, %v793
        %v798 = vadd.f32 %v787, %v794
        %v799 = vstv %s715
        %v800 = vmul.f32 %v799, %v699
        %v801 = vmul.f32 %v799, %v700
        %v804 = vrot.slane %v800, 7
        %v805 = vrot.slane %v801, 7
        %v808 = vadd.f32 %v797, %v804
        %v809 = vadd.f32 %v798, %v805
        %v810 = vmul.f32 %v785, %v655
        %v811 = vmul.f32 %v785, %v656
        %v812 = vmul.f32 %v788, %v685
        %v813 = vmul.f32 %v788, %v686
        %v814 = vadd.f32 %v810, %v812
        %v815 = vadd.f32 %v811, %v813
        %v816 = vmul.f32 %v799, %v703
        %v817 = vmul.f32 %v799, %v704
        %v820 = vrot.slane %v816, 1
        %v821 = vrot.slane %v817, 1
        %v824 = vadd.f32 %v814, %v820
        %v825 = vadd.f32 %v815, %v821
        %v826 = vmul.f32 %v785, %v671
        %v827 = vmul.f32 %v785, %v672
        %v828 = vmul.f32 %v788, %v695
        %v829 = vmul.f32 %v788, %v696
        %v832 = vrot.slane %v828, 1
        %v833 = vrot.slane %v829, 1
        %v836 = vadd.f32 %v826, %v832
        %v837 = vadd.f32 %v827, %v833
        %v838 = vmul.f32 %v799, %v633
        %v839 = vmul.f32 %v799, %v634
        %v840 = vadd.f32 %v836, %v838
        %v841 = vadd.f32 %v837, %v839
        %v842 = vstv %s717
        %v843 = vmul.f32 %v842, %v633
        %v844 = vmul.f32 %v842, %v634
        %v845 = vstv %s719
        %v846 = vmul.f32 %v845, %v675
        %v847 = vmul.f32 %v845, %v676
        %v850 = vrot.slane %v846, 7
        %v851 = vrot.slane %v847, 7
        %v854 = vadd.f32 %v843, %v850
        %v855 = vadd.f32 %v844, %v851
        %v856 = vstv %s721
        %v857 = vmul.f32 %v856, %v699
        %v858 = vmul.f32 %v856, %v700
        %v861 = vrot.slane %v857, 7
        %v862 = vrot.slane %v858, 7
        %v865 = vadd.f32 %v854, %v861
        %v866 = vadd.f32 %v855, %v862
        %v867 = vmul.f32 %v842, %v655
        %v868 = vmul.f32 %v842, %v656
        %v869 = vmul.f32 %v845, %v685
        %v870 = vmul.f32 %v845, %v686
        %v871 = vadd.f32 %v867, %v869
        %v872 = vadd.f32 %v868, %v870
        %v873 = vmul.f32 %v856, %v703
        %v874 = vmul.f32 %v856, %v704
        %v877 = vrot.slane %v873, 1
        %v878 = vrot.slane %v874, 1
        %v881 = vadd.f32 %v871, %v877
        %v882 = vadd.f32 %v872, %v878
        %v883 = vmul.f32 %v842, %v671
        %v884 = vmul.f32 %v842, %v672
        %v885 = vmul.f32 %v845, %v695
        %v886 = vmul.f32 %v845, %v696
        %v889 = vrot.slane %v885, 1
        %v890 = vrot.slane %v886, 1
        %v893 = vadd.f32 %v883, %v889
        %v894 = vadd.f32 %v884, %v890
        %v895 = vmul.f32 %v856, %v633
        %v896 = vmul.f32 %v856, %v634
        %v897 = vadd.f32 %v893, %v895
        %v898 = vadd.f32 %v894, %v896
        %v899 = vmul.f32 %v549, %v549
        %v900 = vmul.f32 %v550, %v550
        %v903 = vrot.slane %v899, 3
        %v904 = vrot.slane %v900, 3
        %v907 = vmul.f32 %v751, %v903
        %v908 = vmul.f32 %v752, %v904
        %v909 = vrot.slane %v899, 5
        %v910 = vrot.slane %v900, 5
        %v913 = vmul.f32 %v767, %v909
        %v914 = vmul.f32 %v768, %v910
        %v915 = vrot.slane %v899, 6
        %v916 = vrot.slane %v900, 6
        %v919 = vmul.f32 %v783, %v915
        %v920 = vmul.f32 %v784, %v916
        %v921 = vmul.f32 %v808, %v903
        %v922 = vmul.f32 %v809, %v904
        %v923 = vmul.f32 %v824, %v909
        %v924 = vmul.f32 %v825, %v910
        %v925 = vmul.f32 %v840, %v915
        %v926 = vmul.f32 %v841, %v916
        %v927 = vmul.f32 %v865, %v903
        %v928 = vmul.f32 %v866, %v904
        %v929 = vmul.f32 %v881, %v909
        %v930 = vmul.f32 %v882, %v910
        %v931 = vmul.f32 %v897, %v915
        %v932 = vmul.f32 %v898, %v916
        %v933 = vmul.f32 %v907, %v751
        %v934 = vmul.f32 %v908, %v752
        %v935 = vmul.f32 %v913, %v767
        %v936 = vmul.f32 %v914, %v768
        %v939 = vrot.slane %v935, 7
        %v940 = vrot.slane %v936, 7
        %v943 = vadd.f32 %v933, %v939
        %v944 = vadd.f32 %v934, %v940
        %v945 = vmul.f32 %v919, %v783
        %v946 = vmul.f32 %v920, %v784
        %v949 = vrot.slane %v945, 7
        %v950 = vrot.slane %v946, 7
        %v953 = vadd.f32 %v943, %v949
        %v954 = vadd.f32 %v944, %v950
        %957 = vst [vmem:[#allocation1] sm:$0xff] %v953
        %958 = vst [vmem:[#allocation1 + $0x9] sm:$0xff] %v954
        %s959 = scalar_lea.vmem [#allocation1], 5
        %v960 = vld [vmem:[%s959] ss:$9 sm:$0xff]
        %v962 = vlaneseq
        %vm963 = vcmp.ge.s32.totalorder %v962, 0
        %vm964 = vcmp.lt.s32.totalorder %v962, 256
        %vm965 = vmand %vm963, %vm964
        %966 = vst.msk [vmem:[%s474] ss:$8 sm:$0x3] %vm965, %v960
        %967 = vst.msk [vmem:[%s474] ss:$8 sm:$0x0] %vm965, %v960
        %v968 = vmul.f32 %v907, %v808
        %v969 = vmul.f32 %v908, %v809
        %v970 = vmul.f32 %v913, %v824
        %v971 = vmul.f32 %v914, %v825
        %v974 = vrot.slane %v970, 7
        %v975 = vrot.slane %v971, 7
        %v978 = vadd.f32 %v968, %v974
        %v979 = vadd.f32 %v969, %v975
        %v980 = vmul.f32 %v919, %v840
        %v981 = vmul.f32 %v920, %v841
        %v984 = vrot.slane %v980, 7
        %v985 = vrot.slane %v981, 7
        %v988 = vadd.f32 %v978, %v984
        %v989 = vadd.f32 %v979, %v985
        %992 = vst [vmem:[#allocation1] sm:$0xff] %v988
        %993 = vst [vmem:[#allocation1 + $0x9] sm:$0xff] %v989
        %s994 = scalar_lea.vmem [#allocation1], 5
        %v995 = vld [vmem:[%s994] ss:$9 sm:$0xff]
        %s997 = scalar_lea.vmem %s474, 1
        %998 = vst.msk [vmem:[%s997] ss:$8 sm:$0x3] %vm965, %v995
        %999 = vst.msk [vmem:[%s997] ss:$8 sm:$0x0] %vm965, %v995
        %v1000 = vmul.f32 %v907, %v865
        %v1001 = vmul.f32 %v908, %v866
        %v1002 = vmul.f32 %v913, %v881
        %v1003 = vmul.f32 %v914, %v882
        %v1006 = vrot.slane %v1002, 7
        %v1007 = vrot.slane %v1003, 7
        %v1010 = vadd.f32 %v1000, %v1006
        %v1011 = vadd.f32 %v1001, %v1007
        %v1012 = vmul.f32 %v919, %v897
        %v1013 = vmul.f32 %v920, %v898
        %v1016 = vrot.slane %v1012, 7
        %v1017 = vrot.slane %v1013, 7
        %v1020 = vadd.f32 %v1010, %v1016
        %v1021 = vadd.f32 %v1011, %v1017
        %1024 = vst [vmem:[#allocation1] sm:$0xff] %v1020
        %1025 = vst [vmem:[#allocation1 + $0x9] sm:$0xff] %v1021
        %s1026 = scalar_lea.vmem [#allocation1], 5
        %v1027 = vld [vmem:[%s1026] ss:$9 sm:$0xff]
        %s1029 = scalar_lea.vmem %s474, 2
        %1030 = vst.msk [vmem:[%s1029] ss:$8 sm:$0x3] %vm965, %v1027
        %1031 = vst.msk [vmem:[%s1029] ss:$8 sm:$0x0] %vm965, %v1027
        %v1032 = vmul.f32 %v921, %v751
        %v1033 = vmul.f32 %v922, %v752
        %v1034 = vmul.f32 %v923, %v767
        %v1035 = vmul.f32 %v924, %v768
        %v1038 = vrot.slane %v1034, 7
        %v1039 = vrot.slane %v1035, 7
        %v1042 = vadd.f32 %v1032, %v1038
        %v1043 = vadd.f32 %v1033, %v1039
        %v1044 = vmul.f32 %v925, %v783
        %v1045 = vmul.f32 %v926, %v784
        %v1048 = vrot.slane %v1044, 7
        %v1049 = vrot.slane %v1045, 7
        %v1052 = vadd.f32 %v1042, %v1048
        %v1053 = vadd.f32 %v1043, %v1049
        %1056 = vst [vmem:[#allocation1] sm:$0xff] %v1052
        %1057 = vst [vmem:[#allocation1 + $0x9] sm:$0xff] %v1053
        %s1058 = scalar_lea.vmem [#allocation1], 5
        %v1059 = vld [vmem:[%s1058] ss:$9 sm:$0xff]
        %s1061 = scalar_lea.vmem %s474, 3
        %1062 = vst.msk [vmem:[%s1061] ss:$8 sm:$0x3] %vm965, %v1059
        %1063 = vst.msk [vmem:[%s1061] ss:$8 sm:$0x0] %vm965, %v1059
        %v1064 = vmul.f32 %v921, %v808
        %v1065 = vmul.f32 %v922, %v809
        %v1066 = vmul.f32 %v923, %v824
        %v1067 = vmul.f32 %v924, %v825
        %v1070 = vrot.slane %v1066, 7
        %v1071 = vrot.slane %v1067, 7
        %v1074 = vadd.f32 %v1064, %v1070
        %v1075 = vadd.f32 %v1065, %v1071
        %v1076 = vmul.f32 %v925, %v840
        %v1077 = vmul.f32 %v926, %v841
        %v1080 = vrot.slane %v1076, 7
        %v1081 = vrot.slane %v1077, 7
        %v1084 = vadd.f32 %v1074, %v1080
        %v1085 = vadd.f32 %v1075, %v1081
        %1088 = vst [vmem:[#allocation1] sm:$0xff] %v1084
        %1089 = vst [vmem:[#allocation1 + $0x9] sm:$0xff] %v1085
        %s1090 = scalar_lea.vmem [#allocation1], 5
        %v1091 = vld [vmem:[%s1090] ss:$9 sm:$0xff]
        %s1093 = scalar_lea.vmem %s474, 4
        %1094 = vst.msk [vmem:[%s1093] ss:$8 sm:$0x3] %vm965, %v1091
        %1095 = vst.msk [vmem:[%s1093] ss:$8 sm:$0x0] %vm965, %v1091
        %v1096 = vmul.f32 %v921, %v865
        %v1097 = vmul.f32 %v922, %v866
        %v1098 = vmul.f32 %v923, %v881
        %v1099 = vmul.f32 %v924, %v882
        %v1102 = vrot.slane %v1098, 7
        %v1103 = vrot.slane %v1099, 7
        %v1106 = vadd.f32 %v1096, %v1102
        %v1107 = vadd.f32 %v1097, %v1103
        %v1108 = vmul.f32 %v925, %v897
        %v1109 = vmul.f32 %v926, %v898
        %v1112 = vrot.slane %v1108, 7
        %v1113 = vrot.slane %v1109, 7
        %v1116 = vadd.f32 %v1106, %v1112
        %v1117 = vadd.f32 %v1107, %v1113
        %1120 = vst [vmem:[#allocation1] sm:$0xff] %v1116
        %1121 = vst [vmem:[#allocation1 + $0x9] sm:$0xff] %v1117
        %s1122 = scalar_lea.vmem [#allocation1], 5
        %v1123 = vld [vmem:[%s1122] ss:$9 sm:$0xff]
        %s1125 = scalar_lea.vmem %s474, 5
        %1126 = vst.msk [vmem:[%s1125] ss:$8 sm:$0x3] %vm965, %v1123
        %1127 = vst.msk [vmem:[%s1125] ss:$8 sm:$0x0] %vm965, %v1123
        %v1128 = vmul.f32 %v927, %v751
        %v1129 = vmul.f32 %v928, %v752
        %v1130 = vmul.f32 %v929, %v767
        %v1131 = vmul.f32 %v930, %v768
        %v1134 = vrot.slane %v1130, 7
        %v1135 = vrot.slane %v1131, 7
        %v1138 = vadd.f32 %v1128, %v1134
        %v1139 = vadd.f32 %v1129, %v1135
        %v1140 = vmul.f32 %v931, %v783
        %v1141 = vmul.f32 %v932, %v784
        %v1144 = vrot.slane %v1140, 7
        %v1145 = vrot.slane %v1141, 7
        %v1148 = vadd.f32 %v1138, %v1144
        %v1149 = vadd.f32 %v1139, %v1145
        %1152 = vst [vmem:[#allocation1] sm:$0xff] %v1148
        %1153 = vst [vmem:[#allocation1 + $0x9] sm:$0xff] %v1149
        %s1154 = scalar_lea.vmem [#allocation1], 5
        %v1155 = vld [vmem:[%s1154] ss:$9 sm:$0xff]
        %s1157 = scalar_lea.vmem %s474, 6
        %1158 = vst.msk [vmem:[%s1157] ss:$8 sm:$0x3] %vm965, %v1155
        %1159 = vst.msk [vmem:[%s1157] ss:$8 sm:$0x0] %vm965, %v1155
        %v1160 = vmul.f32 %v927, %v808
        %v1161 = vmul.f32 %v928, %v809
        %v1162 = vmul.f32 %v929, %v824
        %v1163 = vmul.f32 %v930, %v825
        %v1166 = vrot.slane %v1162, 7
        %v1167 = vrot.slane %v1163, 7
        %v1170 = vadd.f32 %v1160, %v1166
        %v1171 = vadd.f32 %v1161, %v1167
        %v1172 = vmul.f32 %v931, %v840
        %v1173 = vmul.f32 %v932, %v841
        %v1176 = vrot.slane %v1172, 7
        %v1177 = vrot.slane %v1173, 7
        %v1180 = vadd.f32 %v1170, %v1176
        %v1181 = vadd.f32 %v1171, %v1177
        %1184 = vst [vmem:[#allocation1] sm:$0xff] %v1180
        %1185 = vst [vmem:[#allocation1 + $0x9] sm:$0xff] %v1181
        %s1186 = scalar_lea.vmem [#allocation1], 5
        %v1187 = vld [vmem:[%s1186] ss:$9 sm:$0xff]
        %s1189 = scalar_lea.vmem %s474, 7
        %1190 = vst.msk [vmem:[%s1189] ss:$8 sm:$0x3] %vm965, %v1187
        %1191 = vst.msk [vmem:[%s1189] ss:$8 sm:$0x0] %vm965, %v1187
        %v1192 = vmul.f32 %v927, %v865
        %v1193 = vmul.f32 %v928, %v866
        %v1194 = vmul.f32 %v929, %v881
        %v1195 = vmul.f32 %v930, %v882
        %v1198 = vrot.slane %v1194, 7
        %v1199 = vrot.slane %v1195, 7
        %v1202 = vadd.f32 %v1192, %v1198
        %v1203 = vadd.f32 %v1193, %v1199
        %v1204 = vmul.f32 %v931, %v897
        %v1205 = vmul.f32 %v932, %v898
        %v1208 = vrot.slane %v1204, 7
        %v1209 = vrot.slane %v1205, 7
        %v1212 = vadd.f32 %v1202, %v1208
        %v1213 = vadd.f32 %v1203, %v1209
        %1216 = vst [vmem:[#allocation1] sm:$0xff] %v1212
        %1217 = vst [vmem:[#allocation1 + $0x9] sm:$0xff] %v1213
        %s1218 = scalar_lea.vmem [#allocation1], 5
        %v1219 = vld [vmem:[%s1218] ss:$9 sm:$0xff]
        %s1221 = scalar_lea.vmem %s474, 16
        %1222 = vst.msk [vmem:[%s1221] ss:$8 sm:$0x3] %vm965, %v1219
        %1223 = vst.msk [vmem:[%s1221] ss:$8 sm:$0x0] %vm965, %v1219
        %s1224 = scalar_lea.vmem %s439, 7
        %v1225 = vld [vmem:[%s1224] ss:$8 sm:$0x3]
        %1226 = vst.msk [vmem:[%s484] ss:$8 sm:$0x3] %vm965, %v1225
        %1227 = vst.msk [vmem:[%s484] ss:$8 sm:$0x0] %vm965, %v1225
        %s1228 = scalar_lea.vmem %s439, 16
        %v1229 = vld [vmem:[%s1228] ss:$8 sm:$0x3]
        %s1230 = scalar_lea.vmem %s439, 17
        %v1231 = vld [vmem:[%s1230] ss:$8 sm:$0x3]
        %s1232 = scalar_lea.vmem %s439, 18
        %v1233 = vld [vmem:[%s1232] ss:$8 sm:$0x3]
        %v1234 = vmul.f32 %v788, %v1229
        %v1235 = vmul.f32 %v799, %v1231
        %v1236 = vadd.f32 %v1234, %v1235
        %v1237 = vmul.f32 %v785, %v1233
        %v1238 = vadd.f32 %v1236, %v1237
        %v1239 = vmul.f32 %v1238, 0.025
        %s1240 = scalar_lea.vmem %s484, 1
        %1241 = vst.msk [vmem:[%s1240] ss:$8 sm:$0x3] %vm965, %v1239
        %1242 = vst.msk [vmem:[%s1240] ss:$8 sm:$0x0] %vm965, %v1239
        %v1243 = vmul.f32 %v845, %v1229
        %v1244 = vmul.f32 %v856, %v1231
        %v1245 = vadd.f32 %v1243, %v1244
        %v1246 = vmul.f32 %v842, %v1233
        %v1247 = vadd.f32 %v1245, %v1246
        %v1248 = vmul.f32 %v1247, 0.025
        %s1249 = scalar_lea.vmem %s484, 2
        %1250 = vst.msk [vmem:[%s1249] ss:$8 sm:$0x3] %vm965, %v1248
        %1251 = vst.msk [vmem:[%s1249] ss:$8 sm:$0x0] %vm965, %v1248
        %v1252 = vmul.f32 %v731, %v1229
        %v1253 = vmul.f32 %v742, %v1231
        %v1254 = vadd.f32 %v1252, %v1253
        %v1255 = vmul.f32 %v728, %v1233
        %v1256 = vadd.f32 %v1254, %v1255
        %v1257 = vmul.f32 %v1256, 0.025
        %s1258 = scalar_lea.vmem %s484, 3
        %1259 = vst.msk [vmem:[%s1258] ss:$8 sm:$0x3] %vm965, %v1257
        %1260 = vst.msk [vmem:[%s1258] ss:$8 sm:$0x0] %vm965, %v1257
        %s1261 = scalar_lea.vmem %s439, 19
        %v1262 = vld [vmem:[%s1261] ss:$8 sm:$0x3]
        %s1263 = scalar_lea.vmem %s484, 4
        %1264 = vst.msk [vmem:[%s1263] ss:$8 sm:$0x3] %vm965, %v1262
        %1265 = vst.msk [vmem:[%s1263] ss:$8 sm:$0x0] %vm965, %v1262
        %s1266 = scalar_lea.vmem %s439, 20
        %v1267 = vld [vmem:[%s1266] ss:$8 sm:$0x3]
        %s1268 = scalar_lea.vmem %s439, 21
        %v1269 = vld [vmem:[%s1268] ss:$8 sm:$0x3]
        %s1270 = scalar_lea.vmem %s439, 22
        %v1271 = vld [vmem:[%s1270] ss:$8 sm:$0x3]
        %v1272 = vmul.f32 %v788, %v1267
        %v1273 = vmul.f32 %v799, %v1269
        %v1274 = vadd.f32 %v1272, %v1273
        %v1275 = vmul.f32 %v785, %v1271
        %v1276 = vadd.f32 %v1274, %v1275
        %v1277 = vmul.f32 %v1276, 0.025
        %s1278 = scalar_lea.vmem %s484, 5
        %1279 = vst.msk [vmem:[%s1278] ss:$8 sm:$0x3] %vm965, %v1277
        %1280 = vst.msk [vmem:[%s1278] ss:$8 sm:$0x0] %vm965, %v1277
        %v1281 = vmul.f32 %v845, %v1267
        %v1282 = vmul.f32 %v856, %v1269
        %v1283 = vadd.f32 %v1281, %v1282
        %v1284 = vmul.f32 %v842, %v1271
        %v1285 = vadd.f32 %v1283, %v1284
        %v1286 = vmul.f32 %v1285, 0.025
        %s1287 = scalar_lea.vmem %s484, 6
        %1288 = vst.msk [vmem:[%s1287] ss:$8 sm:$0x3] %vm965, %v1286
        %1289 = vst.msk [vmem:[%s1287] ss:$8 sm:$0x0] %vm965, %v1286
        %v1290 = vmul.f32 %v731, %v1267
        %v1291 = vmul.f32 %v742, %v1269
        %v1292 = vadd.f32 %v1290, %v1291
        %v1293 = vmul.f32 %v728, %v1271
        %v1294 = vadd.f32 %v1292, %v1293
        %v1295 = vmul.f32 %v1294, 0.025
        %s1296 = scalar_lea.vmem %s484, 7
        %1297 = vst.msk [vmem:[%s1296] ss:$8 sm:$0x3] %vm965, %v1295
        %1298 = vst.msk [vmem:[%s1296] ss:$8 sm:$0x0] %vm965, %v1295
        %s1299 = scalar_lea.vmem %s439, 23
        %v1300 = vld [vmem:[%s1299] ss:$8 sm:$0x3]
        %s1301 = scalar_lea.vmem %s484, 16
        %1302 = vst.msk [vmem:[%s1301] ss:$8 sm:$0x3] %vm965, %v1300
        %1303 = vst.msk [vmem:[%s1301] ss:$8 sm:$0x0] %vm965, %v1300
        %s1304 = scalar_lea.vmem %s439, 32
        %v1305 = vld [vmem:[%s1304] ss:$8 sm:$0x3]
        %s1306 = scalar_lea.vmem %s439, 33
        %v1307 = vld [vmem:[%s1306] ss:$8 sm:$0x3]
        %s1308 = scalar_lea.vmem %s439, 34
        %v1309 = vld [vmem:[%s1308] ss:$8 sm:$0x3]
        %v1310 = vmul.f32 %v788, %v1305
        %v1311 = vmul.f32 %v799, %v1307
        %v1312 = vadd.f32 %v1310, %v1311
        %v1313 = vmul.f32 %v785, %v1309
        %v1314 = vadd.f32 %v1312, %v1313
        %v1315 = vmul.f32 %v1314, 0.025
        %s1316 = scalar_lea.vmem %s484, 17
        %1317 = vst.msk [vmem:[%s1316] ss:$8 sm:$0x3] %vm965, %v1315
        %1318 = vst.msk [vmem:[%s1316] ss:$8 sm:$0x0] %vm965, %v1315
        %v1319 = vmul.f32 %v845, %v1305
        %v1320 = vmul.f32 %v856, %v1307
        %v1321 = vadd.f32 %v1319, %v1320
        %v1322 = vmul.f32 %v842, %v1309
        %v1323 = vadd.f32 %v1321, %v1322
        %v1324 = vmul.f32 %v1323, 0.025
        %s1325 = scalar_lea.vmem %s484, 18
        %1326 = vst.msk [vmem:[%s1325] ss:$8 sm:$0x3] %vm965, %v1324
        %1327 = vst.msk [vmem:[%s1325] ss:$8 sm:$0x0] %vm965, %v1324
        %v1328 = vmul.f32 %v731, %v1305
        %v1329 = vmul.f32 %v742, %v1307
        %v1330 = vadd.f32 %v1328, %v1329
        %v1331 = vmul.f32 %v728, %v1309
        %v1332 = vadd.f32 %v1330, %v1331
        %v1333 = vmul.f32 %v1332, 0.025
        %s1334 = scalar_lea.vmem %s484, 19
        %1335 = vst.msk [vmem:[%s1334] ss:$8 sm:$0x3] %vm965, %v1333
        %1336 = vst.msk [vmem:[%s1334] ss:$8 sm:$0x0] %vm965, %v1333
        %v1337 = vld [vmem:[%s454] sm:$0x77]
        %v1339 = vrot.slane %v1337, 3
        %v1340 = vsel %vm612, %v1337, %v1339
        %v1342 = vmul.f32 %v498, %v1340
        %1343 = vst [vmem:[#allocation1] sm:$0xff] %v1337
        %s1344 = scalar_lea.vmem [#allocation1], 1
        %v1345 = vld [vmem:[%s1344] ss:$4 sm:$0xff]
        %v1347 = vmul.f32 %v498, %v1345
        %1348 = vst [vmem:[#allocation1] sm:$0xff] %v1337
        %s1349 = scalar_lea.vmem [#allocation1], 2
        %v1350 = vld [vmem:[%s1349] ss:$4 sm:$0xff]
        %v1352 = vmul.f32 %v498, %v1350
        %v1353 = vmul.f32 %v728, %v1342
        %v1354 = vmul.f32 %v731, %v1347
        %v1355 = vadd.f32 %v1353, %v1354
        %v1356 = vmul.f32 %v742, %v1352
        %v1357 = vadd.f32 %v1355, %v1356
        %v1358 = vstv %s723
        %v1359 = vadd.f32 %v1357, %v1358
        %1360 = vst.msk [vmem:[%s464] ss:$4 sm:$0x3] %vm965, %v1359
        %v1361 = vmul.f32 %v785, %v1342
        %v1362 = vmul.f32 %v788, %v1347
        %v1363 = vadd.f32 %v1361, %v1362
        %v1364 = vmul.f32 %v799, %v1352
        %v1365 = vadd.f32 %v1363, %v1364
        %v1366 = vstv %s725
        %v1367 = vadd.f32 %v1365, %v1366
        %s1368 = scalar_lea.vmem %s464, 1
        %1369 = vst.msk [vmem:[%s1368] ss:$4 sm:$0x3] %vm965, %v1367
        %v1370 = vmul.f32 %v842, %v1342
        %v1371 = vmul.f32 %v845, %v1347
        %v1372 = vadd.f32 %v1370, %v1371
        %v1373 = vmul.f32 %v856, %v1352
        %v1374 = vadd.f32 %v1372, %v1373
        %v1375 = vstv %s727
        %v1376 = vadd.f32 %v1374, %v1375
        %s1377 = scalar_lea.vmem %s464, 2
        %1378 = vst.msk [vmem:[%s1377] ss:$4 sm:$0x3] %vm965, %v1376
        %s1379 = smul.u32 2, %s29
        %p1380 = scmp.lt.s32.totalorder %s28, 3
        %s1381 = scalar_select %p1380, %s28, 3
        %p1382 = scmp.lt.s32.totalorder %s1379, 1
        %s1383 = scalar_select %p1382, %s1379, 1
        %s1384 = smul.addr %s1381, 2
        %s1385 = sadd.s32 %s1383, %s1384
        %s1386 = smul.addr %s1385, 4
        %s1387 = scalar_lea.vmem %s4, %s1386
        %s1388 = smul.u32 2, %s29
        %p1389 = scmp.lt.s32.totalorder %s28, 3
        %s1390 = scalar_select %p1389, %s28, 3
        %p1391 = scmp.lt.s32.totalorder %s1388, 1
        %s1392 = scalar_select %p1391, %s1388, 1
        %s1393 = smul.addr %s1390, 4
        %s1394 = sadd.s32 %s1392, %s1393
        %s1395 = smul.addr %s1394, 8
        %s1396 = scalar_lea.vmem %s5, %s1395
        %s1397 = smul.u32 2, %s29
        %p1398 = scmp.lt.s32.totalorder %s28, 3
        %s1399 = scalar_select %p1398, %s28, 3
        %p1400 = scmp.lt.s32.totalorder %s1397, 1
        %s1401 = scalar_select %p1400, %s1397, 1
        %s1402 = smul.addr %s1399, 4
        %s1403 = sadd.s32 %s1401, %s1402
        %s1404 = smul.addr %s1403, 8
        %s1405 = scalar_lea.vmem %s6, %s1404
        %s1406 = smul.u32 2, %s29
        %p1407 = scmp.lt.s32.totalorder %s28, 3
        %s1408 = scalar_select %p1407, %s28, 3
        %p1409 = scmp.lt.s32.totalorder %s1406, 1
        %s1410 = scalar_select %p1409, %s1406, 1
        %s1411 = smul.addr %s1408, 2
        %s1412 = sadd.s32 %s1410, %s1411
        %s1413 = smul.addr %s1412, 4
        %s1414 = scalar_lea.vmem %s7, %s1413
        %s1415 = sand.u32 %s261, 1
        %s1416 = scalar_lea.sflag [#allocation3], %s1415
        %s1417 = sand.u32 %s261, 1
        %s1418 = smul.addr %s1417, 8
        %s1419 = scalar_lea.vmem [#allocation5], %s1418
        // Predicated region
        $region41: #{tpu_custom_call.1} parent=35 // pred_check
          %p1420 = pneg %p159
        $region42: #{tpu_custom_call.1} parent=35 // pred_check_branch
          %1422 = sbr.rel (%p1420) target = $region44
        $region43: #{tpu_custom_call.1} parent=35 // pred_region
          %s1423 = smul.u32 2, %s29
        $region44: #{tpu_custom_call.1} parent=35 // pred_fallthru
          _
        // Predicated region
        $region45: #{tpu_custom_call.1} parent=35 // pred_check
          %p1424 = pneg %p187
        $region46: #{tpu_custom_call.1} parent=35 // pred_check_branch
          %1426 = sbr.rel (%p1424) target = $region48
        $region47: #{tpu_custom_call.1} parent=35 // pred_region
          %s1427 = smul.u32 2, %s29
        $region48: #{tpu_custom_call.1} parent=35 // pred_fallthru
          _
        // Predicated region
        $region49: #{tpu_custom_call.1} parent=35 // pred_check
          %p1428 = pneg %p215
        $region50: #{tpu_custom_call.1} parent=35 // pred_check_branch
          %1430 = sbr.rel (%p1428) target = $region52
        $region51: #{tpu_custom_call.1} parent=35 // pred_region
          %s1431 = smul.u32 2, %s29
        $region52: #{tpu_custom_call.1} parent=35 // pred_fallthru
          _
        // Predicated region
        $region53: #{tpu_custom_call.1} parent=35 // pred_check
          %p1432 = pneg %p243
        $region54: #{tpu_custom_call.1} parent=35 // pred_check_branch
          %1434 = sbr.rel (%p1432) target = $region56
        $region55: #{tpu_custom_call.1} parent=35 // pred_region
          %s1435 = smul.u32 2, %s29
        $region56: #{tpu_custom_call.1} parent=35 // pred_fallthru
          _
        // Predicated region
        $region57: #{tpu_custom_call.1} parent=35 // pred_check
          %p1436 = pneg %p271
        $region58: #{tpu_custom_call.1} parent=35 // pred_check_branch
          %1438 = sbr.rel (%p1436) target = $region60
        $region59: #{tpu_custom_call.1} parent=35 // pred_region
          %s1439 = smul.u32 2, %s29
          %1441 = vsyncadd %s1416, 0
          %s1442 = smul.addr %s28, 2
          %s1443 = sadd.s32 %s1439, %s1442
          %s1444 = smul.addr %s1443, 4
          %s1445 = scalar_lea.hbm %s8, %s1444
          %s1447 = sshll.u32 %s1419, 4
          %s1448 = int_to_ptr.vmem [resolvable:$true] %s1447
          %s1449 = sshll.u32 %s1445, 4
          %s1450 = int_to_ptr.hbm [resolvable:$true] %s1449
          %1452 = dma.vmem_to_hbm [thread:$0]  %s1448, 128, %s1450, %s1416
        $region60: #{tpu_custom_call.1} parent=35 // pred_fallthru
          _
      $region36: #{tpu_custom_call.1} parent=5 // pred_fallthru
        _
      %p1453 = scmp.le.s32.totalorder 2, %s19
      // Predicated region
      $region61: #{tpu_custom_call.1} parent=5 // pred_check
        %p1454 = pneg %p1453
      $region62: #{tpu_custom_call.1} parent=5 // pred_check_branch
        %1456 = sbr.rel (%p1454) target = $region64
      $region63: #{tpu_custom_call.1} parent=5 // pred_region
        %s1457 = ssub.s32 %s19, 2
        // Predicated region
        $region65: #{tpu_custom_call.1} parent=63 // pred_check
          %p1458 = pneg %p165
        $region66: #{tpu_custom_call.1} parent=63 // pred_check_branch
          %1460 = sbr.rel (%p1458) target = $region68
        $region67: #{tpu_custom_call.1} parent=63 // pred_region
          %s1461 = smul.u32 2, %s31
          %p1462 = scmp.lt.s32.totalorder %s30, 3
          %s1463 = scalar_select %p1462, %s30, 3
          %p1464 = scmp.lt.s32.totalorder %s1461, 1
          %s1465 = scalar_select %p1464, %s1461, 1
          %s1466 = smul.addr %s1463, 2
          %s1467 = sadd.s32 %s1465, %s1466
          %s1468 = smul.addr %s1467, 4
          %s1469 = scalar_lea.vmem %s4, %s1468
        $region68: #{tpu_custom_call.1} parent=63 // pred_fallthru
          _
        // Predicated region
        $region69: #{tpu_custom_call.1} parent=63 // pred_check
          %p1470 = pneg %p193
        $region70: #{tpu_custom_call.1} parent=63 // pred_check_branch
          %1472 = sbr.rel (%p1470) target = $region72
        $region71: #{tpu_custom_call.1} parent=63 // pred_region
          %s1473 = smul.u32 2, %s31
          %p1474 = scmp.lt.s32.totalorder %s30, 3
          %s1475 = scalar_select %p1474, %s30, 3
          %p1476 = scmp.lt.s32.totalorder %s1473, 1
          %s1477 = scalar_select %p1476, %s1473, 1
          %s1478 = smul.addr %s1475, 4
          %s1479 = sadd.s32 %s1477, %s1478
          %s1480 = smul.addr %s1479, 8
          %s1481 = scalar_lea.vmem %s5, %s1480
        $region72: #{tpu_custom_call.1} parent=63 // pred_fallthru
          _
        // Predicated region
        $region73: #{tpu_custom_call.1} parent=63 // pred_check
          %p1482 = pneg %p221
        $region74: #{tpu_custom_call.1} parent=63 // pred_check_branch
          %1484 = sbr.rel (%p1482) target = $region76
        $region75: #{tpu_custom_call.1} parent=63 // pred_region
          %s1485 = smul.u32 2, %s31
          %p1486 = scmp.lt.s32.totalorder %s30, 3
          %s1487 = scalar_select %p1486, %s30, 3
          %p1488 = scmp.lt.s32.totalorder %s1485, 1
          %s1489 = scalar_select %p1488, %s1485, 1
          %s1490 = smul.addr %s1487, 4
          %s1491 = sadd.s32 %s1489, %s1490
          %s1492 = smul.addr %s1491, 8
          %s1493 = scalar_lea.vmem %s6, %s1492
        $region76: #{tpu_custom_call.1} parent=63 // pred_fallthru
          _
        // Predicated region
        $region77: #{tpu_custom_call.1} parent=63 // pred_check
          %p1494 = pneg %p249
        $region78: #{tpu_custom_call.1} parent=63 // pred_check_branch
          %1496 = sbr.rel (%p1494) target = $region80
        $region79: #{tpu_custom_call.1} parent=63 // pred_region
          %s1497 = smul.u32 2, %s31
          %p1498 = scmp.lt.s32.totalorder %s30, 3
          %s1499 = scalar_select %p1498, %s30, 3
          %p1500 = scmp.lt.s32.totalorder %s1497, 1
          %s1501 = scalar_select %p1500, %s1497, 1
          %s1502 = smul.addr %s1499, 2
          %s1503 = sadd.s32 %s1501, %s1502
          %s1504 = smul.addr %s1503, 4
          %s1505 = scalar_lea.vmem %s7, %s1504
        $region80: #{tpu_custom_call.1} parent=63 // pred_fallthru
          _
        // Predicated region
        $region81: #{tpu_custom_call.1} parent=63 // pred_check
          %p1506 = pneg %p277
        $region82: #{tpu_custom_call.1} parent=63 // pred_check_branch
          %1508 = sbr.rel (%p1506) target = $region84
        $region83: #{tpu_custom_call.1} parent=63 // pred_region
          %s1509 = sand.u32 %s262, 1
          %s1510 = scalar_lea.sflag [#allocation3], %s1509
          %s1511 = sand.u32 %s262, 1
          %s1512 = smul.addr %s1511, 8
          %s1513 = scalar_lea.vmem [#allocation5], %s1512
          %1515 = dma.done %s1510, 128
        $region84: #{tpu_custom_call.1} parent=63 // pred_fallthru
          _
      $region64: #{tpu_custom_call.1} parent=5 // pred_fallthru
        _
    $region6: #{tpu_custom_call.1} parent=1 // loop_footer
      %s23 = sadd.s32 1, %s19
    $region7: #{tpu_custom_call.1} parent=1 // loop_footer_branch
      %18 = sbr.rel target = $region3
    $region8: #{tpu_custom_call.1} parent=1 // loop_exit
      _
    %1516 = vsyncpa [#allocation3], 1
    %s1517 = scalar_lea.sflag [#allocation3], 1
    %1518 = vsyncpa %s1517, 1
    %1519 = vsyncpa [#allocation4], 1
    %s1520 = scalar_lea.sflag [#allocation4], 1
    %1521 = vsyncpa %s1520, 1

</llo_original>
